<compile_context>
chip_gen: v6e
topology: v6e:2x2x1
jax: 0.10.0
libtpu: 0.0.40
codegen_flags: <defaults>
</compile_context>

<pallas_src>
import functools

import jax
import jax.numpy as jnp
from jax import lax
from jax.experimental import pallas as pl
from jax.experimental.pallas import tpu as pltpu

_EPS = 1e-5


# ----------------------------------------------------------------------------
# Host-side glue: per-tap (upsample + halo + shift) matrices
# ----------------------------------------------------------------------------
def _interp_matrix(out_size, in_size):
    """(out_size, in_size) bilinear weights matching PyTorch align_corners=True."""
    if in_size == 1:
        return jnp.ones((out_size, 1), jnp.float32)
    if out_size == 1:
        return jnp.zeros((1, in_size), jnp.float32).at[0, 0].set(1.0)
    src = jnp.arange(out_size, dtype=jnp.float32) * (in_size - 1) / (out_size - 1)
    lo = jnp.clip(jnp.floor(src).astype(jnp.int32), 0, in_size - 2)
    w_hi = src - lo.astype(jnp.float32)
    rows = jnp.arange(out_size)
    m = jnp.zeros((out_size, in_size), jnp.float32)
    m = m.at[rows, lo].add(1.0 - w_hi)
    m = m.at[rows, lo + 1].add(w_hi)
    return m


def _tap_matrices(H, W, Hp, Wp):
    """(9, Hp*Wp, H*W): tap k=(dy,dx) maps low-res pixels -> the value the 3x3
    conv reads at padded position (i+dy, j+dx) for every output pixel (i,j).
    Conv halo zeros are baked in (border rows of the padded interp matrices)."""
    ah = _interp_matrix(H, Hp)                                     # (H, Hp)
    aw = _interp_matrix(W, Wp)                                     # (W, Wp)
    ah_pad = jnp.zeros((H + 2, Hp), jnp.float32).at[1:H + 1].set(ah)
    aw_pad = jnp.zeros((W + 2, Wp), jnp.float32).at[1:W + 1].set(aw)
    taps = []
    for dy in range(3):
        for dx in range(3):
            m = jnp.einsum("ip,jq->pqij", ah_pad[dy:dy + H], aw_pad[dx:dx + W])
            taps.append(m.reshape(Hp * Wp, H * W))
    return jnp.stack(taps, axis=0)                                 # (9, PQ, HW)


# ----------------------------------------------------------------------------
# Fused kernel: (upsample+halo+im2col) matmuls -> deep-K conv -> BN/ReLU/add
# ----------------------------------------------------------------------------
def _gam_kernel(pre_ref, rgb_ref, mtap_ref, wc_ref, sh_ref, o_ref, patches_ref,
                *, Bt, C1, C2, HW):
    # (1)+(2) Bilinear upsample + halo + tap shift: 9 lane-dense MXU matmuls.
    #         Results land in sublane-aligned blocks of the bf16 patches scratch.
    for k in range(9):
        tap = jnp.dot(pre_ref[...], mtap_ref[k],
                      preferred_element_type=jnp.float32)          # (Bt*C1, HW)
        for b in range(Bt):
            patches_ref[k * C1:(k + 1) * C1, b * HW:(b + 1) * HW] = (
                tap[b * C1:(b + 1) * C1, :].astype(jnp.bfloat16))

    # (3) 3x3 conv (BN scale pre-folded into wc): ONE deep-K matmul,
    #     N = Bt*HW lanes (512 here -> multiple of 256 for v6e/v7x MXU).
    y = jnp.dot(wc_ref[...], patches_ref[...],
                preferred_element_type=jnp.float32)                # (C2, Bt*HW)

    # (4) shift (BN shift + conv bias) + ReLU + residual; lane-dense stores.
    sh = sh_ref[...]                                               # (C2, 1)
    for b in range(Bt):
        yb = jnp.maximum(y[:, b * HW:(b + 1) * HW] + sh, 0.0)
        o_ref[b] = (yb + rgb_ref[b]).astype(o_ref.dtype)


def gam_forward(rgb, pre, params, *, batch_tile=None):
    """GAM forward. rgb: (B, C2, H, W), pre: (B, C1, Hp, Wp) -> (B, C2, H, W)."""
    B, C2, H, W = rgb.shape
    Bp, C1, Hp, Wp = pre.shape
    assert Bp == B
    HW, PQ = H * W, Hp * Wp
    Bt = B if batch_tile is None else batch_tile
    assert B % Bt == 0

    # ---- host-side prep (weights / tiny constant matrices only) ----
    m_taps = _tap_matrices(H, W, Hp, Wp).astype(jnp.bfloat16)       # (9, PQ, HW)
    scale = params["gamma"] / jnp.sqrt(params["var"] + _EPS)
    shift = (params["beta"] + (params["bias"] - params["mean"]) * scale
             ).reshape(C2, 1).astype(jnp.float32)
    wc = (jnp.transpose(params["w"], (0, 2, 3, 1)).reshape(C2, 9 * C1)
          * scale[:, None]).astype(jnp.bfloat16)                    # BN scale folded
    pre_in = pre.reshape(B * C1, PQ).astype(jnp.bfloat16)           # pure reshape
    rgb_in = rgb.reshape(B, C2, HW)                                  # pure reshape

    kernel = functools.partial(_gam_kernel, Bt=Bt, C1=C1, C2=C2, HW=HW)
    out = pl.pallas_call(
        kernel,
        out_shape=jax.ShapeDtypeStruct((B, C2, HW), jnp.float32),
        grid=(B // Bt,),
        in_specs=[
            pl.BlockSpec((Bt * C1, PQ), lambda i: (i, 0)),
            pl.BlockSpec((Bt, C2, HW), lambda i: (i, 0, 0)),
            pl.BlockSpec((9, PQ, HW), lambda i: (0, 0, 0)),
            pl.BlockSpec((C2, 9 * C1), lambda i: (0, 0)),
            pl.BlockSpec((C2, 1), lambda i: (0, 0)),
        ],
        out_specs=pl.BlockSpec((Bt, C2, HW), lambda i: (i, 0, 0)),
        scratch_shapes=[pltpu.VMEM((9 * C1, Bt * HW), jnp.bfloat16)],
        compiler_params=pltpu.CompilerParams(
            dimension_semantics=("parallel",)),
    )(pre_in, rgb_in, m_taps, wc, shift)
    return out.reshape(B, C2, H, W)


# ----------------------------------------------------------------------------
# Pure-JAX reference (f32, HIGHEST precision) and synthetic params
# ----------------------------------------------------------------------------
def gam_reference(rgb, pre, params):
    _, C2, H, W = rgb.shape
    _, C1, Hp, Wp = pre.shape
    a = _interp_matrix(H, Hp)
    b = _interp_matrix(W, Wp)
    up = jnp.einsum("hp,wq,bcpq->bchw", a, b, pre,
                    precision=lax.Precision.HIGHEST)
    z = lax.conv_general_dilated(up, params["w"], (1, 1), ((1, 1), (1, 1)),
                                 dimension_numbers=("NCHW", "OIHW", "NCHW"),
                                 precision=lax.Precision.HIGHEST)
    z = z + params["bias"][None, :, None, None]
    scale = params["gamma"] / jnp.sqrt(params["var"] + _EPS)
    shift = params["beta"] - params["mean"] * scale
    z = z * scale[None, :, None, None] + shift[None, :, None, None]
    return jnp.maximum(z, 0.0) + rgb


def init_params(key, c1, c2):
    ks = jax.random.split(key, 6)
    return dict(
        w=0.1 * jax.random.normal(ks[0], (c2, c1, 3, 3), jnp.float32),
        bias=0.1 * jax.random.normal(ks[1], (c2,), jnp.float32),
        gamma=1.0 + 0.1 * jax.random.normal(ks[2], (c2,), jnp.float32),
        beta=0.1 * jax.random.normal(ks[3], (c2,), jnp.float32),
        mean=0.1 * jax.random.normal(ks[4], (c2,), jnp.float32),
        var=1.0 + jnp.abs(0.1 * jax.random.normal(ks[5], (c2,), jnp.float32)),
    )


if __name__ == "__main__":
    key = jax.random.PRNGKey(0)
    k_rgb, k_pre, k_par = jax.random.split(key, 3)
    B, C1, C2 = 2, 16, 32          # GAM(ch_1=16, ch_2=32)
    H, W = 16, 16                  # rgb spatial size
    Hp, Wp = 8, 8                  # low-res 'pre' gets upsampled 2x
    rgb = jax.random.normal(k_rgb, (B, C2, H, W), jnp.float32)
    pre = jax.random.normal(k_pre, (B, C1, Hp, Wp), jnp.float32)
    params = init_params(k_par, C1, C2)

    fwd = jax.jit(gam_forward)
    y = jax.block_until_ready(fwd(rgb, pre, params))
    y_ref = jax.block_until_ready(gam_reference(rgb, pre, params))

    assert y.shape == (B, C2, H, W)
    assert bool(jnp.all(jnp.isfinite(y)))
    err = float(jnp.max(jnp.abs(y - y_ref)))
    # bf16 matmul operands (f32 accumulation) vs f32 HIGHEST reference.
    tol = 3e-2 + 2e-2 * float(jnp.max(jnp.abs(y_ref)))
    assert err <= tol, f"mismatch vs reference: max abs err {err} > {tol}"
    print("KERNEL_OK")
</pallas_src>

<mosaic_0001>
module attributes {stable_mosaic.version = 11 : i64} {
  func.func private @main(%arg0: i32) attributes {dimension_semantics = [#tpu.dimension_semantics<core_parallel>], iteration_bounds = array<i64: 2>, tpu.core_type = #tpu.core_type<sc_scalar_subcore>, window_params = []} {
    return
  }
}

module attributes {stable_mosaic.version = 11 : i64} {
  func.func private @main(%arg0: i32) attributes {dimension_semantics = [#tpu.dimension_semantics<core_parallel>], iteration_bounds = array<i64: 2>, tpu.core_type = #tpu.core_type<sc_scalar_subcore>, window_params = []} {
    return
  }
}

module attributes {stable_mosaic.version = 11 : i64} {
  func.func @_gam_kernel(%arg0: i32, %arg1: memref<32x64xbf16, #tpu.memory_space<vmem>>, %arg2: memref<2x32x256xf32, #tpu.memory_space<vmem>>, %arg3: memref<9x64x256xbf16, #tpu.memory_space<vmem>>, %arg4: memref<32x144xbf16, #tpu.memory_space<vmem>>, %arg5: memref<32x1xf32, #tpu.memory_space<vmem>>, %arg6: memref<2x32x256xf32, #tpu.memory_space<vmem>>, %arg7: memref<144x512xbf16, #tpu.memory_space<vmem>>) attributes {dimension_semantics = [#tpu.dimension_semantics<parallel>], iteration_bounds = array<i64: 1>, scalar_prefetch = 0 : i64, scratch_operands = 1 : i64, tpu.core_type = #tpu.core_type<tc>, window_params = [{transform_indices = @transform_0, window_bounds = array<i64: 32, 64>}, {transform_indices = @transform_1, window_bounds = array<i64: 2, 32, 256>}, {pipeline_mode = #tpu.pipeline_mode<synchronous>, transform_indices = @transform_2, window_bounds = array<i64: 9, 64, 256>}, {pipeline_mode = #tpu.pipeline_mode<synchronous>, transform_indices = @transform_3, window_bounds = array<i64: 32, 144>}, {pipeline_mode = #tpu.pipeline_mode<synchronous>, transform_indices = @transform_4, window_bounds = array<i64: 32, 1>}, {transform_indices = @transform_5, window_bounds = array<i64: 2, 32, 256>}]} {
    %c0 = arith.constant 0 : index
    %c0_0 = arith.constant 0 : index
    %0 = vector.load %arg1[%c0, %c0_0] : memref<32x64xbf16, #tpu.memory_space<vmem>>, vector<32x64xbf16>
    %c0_1 = arith.constant 0 : index
    %c0_2 = arith.constant 0 : index
    %c0_3 = arith.constant 0 : index
    %1 = vector.load %arg3[%c0_1, %c0_2, %c0_3] : memref<9x64x256xbf16, #tpu.memory_space<vmem>>, vector<1x64x256xbf16>
    %2 = vector.shape_cast %1 : vector<1x64x256xbf16> to vector<64x256xbf16>
    %cst = arith.constant dense<0.000000e+00> : vector<32x256xf32>
    %3 = tpu.matmul %0, %2, %cst {dimension_numbers = #tpu.dot_dimension_numbers<[1], [0], [0], [1], [0, 0, 1, 1], [], []>} : vector<32x64xbf16>, vector<64x256xbf16>, vector<32x256xf32> -> vector<32x256xf32>
    %4 = vector.extract_strided_slice %3 {offsets = [0, 0], sizes = [16, 256], strides = [1, 1]} : vector<32x256xf32> to vector<16x256xf32>
    %5 = arith.truncf %4 : vector<16x256xf32> to vector<16x256xbf16>
    %c0_4 = arith.constant 0 : index
    %c0_5 = arith.constant 0 : index
    %6 = vector.load %arg7[%c0_4, %c0_5] : memref<144x512xbf16, #tpu.memory_space<vmem>>, vector<16x256xbf16>
    tpu.vector_store %arg7[%c0_4, %c0_5], %5 {strides = array<i32>} : memref<144x512xbf16, #tpu.memory_space<vmem>>, vector<16x256xbf16>,
    %7 = vector.extract_strided_slice %3 {offsets = [16, 0], sizes = [16, 256], strides = [1, 1]} : vector<32x256xf32> to vector<16x256xf32>
    %8 = arith.truncf %7 : vector<16x256xf32> to vector<16x256xbf16>
    %c0_6 = arith.constant 0 : index
    %c256 = arith.constant 256 : index
    %9 = vector.load %arg7[%c0_6, %c256] : memref<144x512xbf16, #tpu.memory_space<vmem>>, vector<16x256xbf16>
    tpu.vector_store %arg7[%c0_6, %c256], %8 {strides = array<i32>} : memref<144x512xbf16, #tpu.memory_space<vmem>>, vector<16x256xbf16>,
    %c0_7 = arith.constant 0 : index
    %c0_8 = arith.constant 0 : index
    %10 = vector.load %arg1[%c0_7, %c0_8] : memref<32x64xbf16, #tpu.memory_space<vmem>>, vector<32x64xbf16>
    %c1 = arith.constant 1 : index
    %c0_9 = arith.constant 0 : index
    %c0_10 = arith.constant 0 : index
    %11 = vector.load %arg3[%c1, %c0_9, %c0_10] : memref<9x64x256xbf16, #tpu.memory_space<vmem>>, vector<1x64x256xbf16>
    %12 = vector.shape_cast %11 : vector<1x64x256xbf16> to vector<64x256xbf16>
    %cst_11 = arith.constant dense<0.000000e+00> : vector<32x256xf32>
    %13 = tpu.matmul %10, %12, %cst_11 {dimension_numbers = #tpu.dot_dimension_numbers<[1], [0], [0], [1], [0, 0, 1, 1], [], []>} : vector<32x64xbf16>, vector<64x256xbf16>, vector<32x256xf32> -> vector<32x256xf32>
    %14 = vector.extract_strided_slice %13 {offsets = [0, 0], sizes = [16, 256], strides = [1, 1]} : vector<32x256xf32> to vector<16x256xf32>
    %15 = arith.truncf %14 : vector<16x256xf32> to vector<16x256xbf16>
    %c16 = arith.constant 16 : index
    %c0_12 = arith.constant 0 : index
    %16 = vector.load %arg7[%c16, %c0_12] : memref<144x512xbf16, #tpu.memory_space<vmem>>, vector<16x256xbf16>
    tpu.vector_store %arg7[%c16, %c0_12], %15 {strides = array<i32>} : memref<144x512xbf16, #tpu.memory_space<vmem>>, vector<16x256xbf16>,
    %17 = vector.extract_strided_slice %13 {offsets = [16, 0], sizes = [16, 256], strides = [1, 1]} : vector<32x256xf32> to vector<16x256xf32>
    %18 = arith.truncf %17 : vector<16x256xf32> to vector<16x256xbf16>
    %c16_13 = arith.constant 16 : index
    %c256_14 = arith.constant 256 : index
    %19 = vector.load %arg7[%c16_13, %c256_14] : memref<144x512xbf16, #tpu.memory_space<vmem>>, vector<16x256xbf16>
    tpu.vector_store %arg7[%c16_13, %c256_14], %18 {strides = array<i32>} : memref<144x512xbf16, #tpu.memory_space<vmem>>, vector<16x256xbf16>,
    %c0_15 = arith.constant 0 : index
    %c0_16 = arith.constant 0 : index
    %20 = vector.load %arg1[%c0_15, %c0_16] : memref<32x64xbf16, #tpu.memory_space<vmem>>, vector<32x64xbf16>
    %c2 = arith.constant 2 : index
    %c0_17 = arith.constant 0 : index
    %c0_18 = arith.constant 0 : index
    %21 = vector.load %arg3[%c2, %c0_17, %c0_18] : memref<9x64x256xbf16, #tpu.memory_space<vmem>>, vector<1x64x256xbf16>
    %22 = vector.shape_cast %21 : vector<1x64x256xbf16> to vector<64x256xbf16>
    %cst_19 = arith.constant dense<0.000000e+00> : vector<32x256xf32>
    %23 = tpu.matmul %20, %22, %cst_19 {dimension_numbers = #tpu.dot_dimension_numbers<[1], [0], [0], [1], [0, 0, 1, 1], [], []>} : vector<32x64xbf16>, vector<64x256xbf16>, vector<32x256xf32> -> vector<32x256xf32>
    %24 = vector.extract_strided_slice %23 {offsets = [0, 0], sizes = [16, 256], strides = [1, 1]} : vector<32x256xf32> to vector<16x256xf32>
    %25 = arith.truncf %24 : vector<16x256xf32> to vector<16x256xbf16>
    %c32 = arith.constant 32 : index
    %c0_20 = arith.constant 0 : index
    %26 = vector.load %arg7[%c32, %c0_20] : memref<144x512xbf16, #tpu.memory_space<vmem>>, vector<16x256xbf16>
    tpu.vector_store %arg7[%c32, %c0_20], %25 {strides = array<i32>} : memref<144x512xbf16, #tpu.memory_space<vmem>>, vector<16x256xbf16>,
    %27 = vector.extract_strided_slice %23 {offsets = [16, 0], sizes = [16, 256], strides = [1, 1]} : vector<32x256xf32> to vector<16x256xf32>
    %28 = arith.truncf %27 : vector<16x256xf32> to vector<16x256xbf16>
    %c32_21 = arith.constant 32 : index
    %c256_22 = arith.constant 256 : index
    %29 = vector.load %arg7[%c32_21, %c256_22] : memref<144x512xbf16, #tpu.memory_space<vmem>>, vector<16x256xbf16>
    tpu.vector_store %arg7[%c32_21, %c256_22], %28 {strides = array<i32>} : memref<144x512xbf16, #tpu.memory_space<vmem>>, vector<16x256xbf16>,
    %c0_23 = arith.constant 0 : index
    %c0_24 = arith.constant 0 : index
    %30 = vector.load %arg1[%c0_23, %c0_24] : memref<32x64xbf16, #tpu.memory_space<vmem>>, vector<32x64xbf16>
    %c3 = arith.constant 3 : index
    %c0_25 = arith.constant 0 : index
    %c0_26 = arith.constant 0 : index
    %31 = vector.load %arg3[%c3, %c0_25, %c0_26] : memref<9x64x256xbf16, #tpu.memory_space<vmem>>, vector<1x64x256xbf16>
    %32 = vector.shape_cast %31 : vector<1x64x256xbf16> to vector<64x256xbf16>
    %cst_27 = arith.constant dense<0.000000e+00> : vector<32x256xf32>
    %33 = tpu.matmul %30, %32, %cst_27 {dimension_numbers = #tpu.dot_dimension_numbers<[1], [0], [0], [1], [0, 0, 1, 1], [], []>} : vector<32x64xbf16>, vector<64x256xbf16>, vector<32x256xf32> -> vector<32x256xf32>
    %34 = vector.extract_strided_slice %33 {offsets = [0, 0], sizes = [16, 256], strides = [1, 1]} : vector<32x256xf32> to vector<16x256xf32>
    %35 = arith.truncf %34 : vector<16x256xf32> to vector<16x256xbf16>
    %c48 = arith.constant 48 : index
    %c0_28 = arith.constant 0 : index
    %36 = vector.load %arg7[%c48, %c0_28] : memref<144x512xbf16, #tpu.memory_space<vmem>>, vector<16x256xbf16>
    tpu.vector_store %arg7[%c48, %c0_28], %35 {strides = array<i32>} : memref<144x512xbf16, #tpu.memory_space<vmem>>, vector<16x256xbf16>,
    %37 = vector.extract_strided_slice %33 {offsets = [16, 0], sizes = [16, 256], strides = [1, 1]} : vector<32x256xf32> to vector<16x256xf32>
    %38 = arith.truncf %37 : vector<16x256xf32> to vector<16x256xbf16>
    %c48_29 = arith.constant 48 : index
    %c256_30 = arith.constant 256 : index
    %39 = vector.load %arg7[%c48_29, %c256_30] : memref<144x512xbf16, #tpu.memory_space<vmem>>, vector<16x256xbf16>
    tpu.vector_store %arg7[%c48_29, %c256_30], %38 {strides = array<i32>} : memref<144x512xbf16, #tpu.memory_space<vmem>>, vector<16x256xbf16>,
    %c0_31 = arith.constant 0 : index
    %c0_32 = arith.constant 0 : index
    %40 = vector.load %arg1[%c0_31, %c0_32] : memref<32x64xbf16, #tpu.memory_space<vmem>>, vector<32x64xbf16>
    %c4 = arith.constant 4 : index
    %c0_33 = arith.constant 0 : index
    %c0_34 = arith.constant 0 : index
    %41 = vector.load %arg3[%c4, %c0_33, %c0_34] : memref<9x64x256xbf16, #tpu.memory_space<vmem>>, vector<1x64x256xbf16>
    %42 = vector.shape_cast %41 : vector<1x64x256xbf16> to vector<64x256xbf16>
    %cst_35 = arith.constant dense<0.000000e+00> : vector<32x256xf32>
    %43 = tpu.matmul %40, %42, %cst_35 {dimension_numbers = #tpu.dot_dimension_numbers<[1], [0], [0], [1], [0, 0, 1, 1], [], []>} : vector<32x64xbf16>, vector<64x256xbf16>, vector<32x256xf32> -> vector<32x256xf32>
    %44 = vector.extract_strided_slice %43 {offsets = [0, 0], sizes = [16, 256], strides = [1, 1]} : vector<32x256xf32> to vector<16x256xf32>
    %45 = arith.truncf %44 : vector<16x256xf32> to vector<16x256xbf16>
    %c64 = arith.constant 64 : index
    %c0_36 = arith.constant 0 : index
    %46 = vector.load %arg7[%c64, %c0_36] : memref<144x512xbf16, #tpu.memory_space<vmem>>, vector<16x256xbf16>
    tpu.vector_store %arg7[%c64, %c0_36], %45 {strides = array<i32>} : memref<144x512xbf16, #tpu.memory_space<vmem>>, vector<16x256xbf16>,
    %47 = vector.extract_strided_slice %43 {offsets = [16, 0], sizes = [16, 256], strides = [1, 1]} : vector<32x256xf32> to vector<16x256xf32>
    %48 = arith.truncf %47 : vector<16x256xf32> to vector<16x256xbf16>
    %c64_37 = arith.constant 64 : index
    %c256_38 = arith.constant 256 : index
    %49 = vector.load %arg7[%c64_37, %c256_38] : memref<144x512xbf16, #tpu.memory_space<vmem>>, vector<16x256xbf16>
    tpu.vector_store %arg7[%c64_37, %c256_38], %48 {strides = array<i32>} : memref<144x512xbf16, #tpu.memory_space<vmem>>, vector<16x256xbf16>,
    %c0_39 = arith.constant 0 : index
    %c0_40 = arith.constant 0 : index
    %50 = vector.load %arg1[%c0_39, %c0_40] : memref<32x64xbf16, #tpu.memory_space<vmem>>, vector<32x64xbf16>
    %c5 = arith.constant 5 : index
    %c0_41 = arith.constant 0 : index
    %c0_42 = arith.constant 0 : index
    %51 = vector.load %arg3[%c5, %c0_41, %c0_42] : memref<9x64x256xbf16, #tpu.memory_space<vmem>>, vector<1x64x256xbf16>
    %52 = vector.shape_cast %51 : vector<1x64x256xbf16> to vector<64x256xbf16>
    %cst_43 = arith.constant dense<0.000000e+00> : vector<32x256xf32>
    %53 = tpu.matmul %50, %52, %cst_43 {dimension_numbers = #tpu.dot_dimension_numbers<[1], [0], [0], [1], [0, 0, 1, 1], [], []>} : vector<32x64xbf16>, vector<64x256xbf16>, vector<32x256xf32> -> vector<32x256xf32>
    %54 = vector.extract_strided_slice %53 {offsets = [0, 0], sizes = [16, 256], strides = [1, 1]} : vector<32x256xf32> to vector<16x256xf32>
    %55 = arith.truncf %54 : vector<16x256xf32> to vector<16x256xbf16>
    %c80 = arith.constant 80 : index
    %c0_44 = arith.constant 0 : index
    %56 = vector.load %arg7[%c80, %c0_44] : memref<144x512xbf16, #tpu.memory_space<vmem>>, vector<16x256xbf16>
    tpu.vector_store %arg7[%c80, %c0_44], %55 {strides = array<i32>} : memref<144x512xbf16, #tpu.memory_space<vmem>>, vector<16x256xbf16>,
    %57 = vector.extract_strided_slice %53 {offsets = [16, 0], sizes = [16, 256], strides = [1, 1]} : vector<32x256xf32> to vector<16x256xf32>
    %58 = arith.truncf %57 : vector<16x256xf32> to vector<16x256xbf16>
    %c80_45 = arith.constant 80 : index
    %c256_46 = arith.constant 256 : index
    %59 = vector.load %arg7[%c80_45, %c256_46] : memref<144x512xbf16, #tpu.memory_space<vmem>>, vector<16x256xbf16>
    tpu.vector_store %arg7[%c80_45, %c256_46], %58 {strides = array<i32>} : memref<144x512xbf16, #tpu.memory_space<vmem>>, vector<16x256xbf16>,
    %c0_47 = arith.constant 0 : index
    %c0_48 = arith.constant 0 : index
    %60 = vector.load %arg1[%c0_47, %c0_48] : memref<32x64xbf16, #tpu.memory_space<vmem>>, vector<32x64xbf16>
    %c6 = arith.constant 6 : index
    %c0_49 = arith.constant 0 : index
    %c0_50 = arith.constant 0 : index
    %61 = vector.load %arg3[%c6, %c0_49, %c0_50] : memref<9x64x256xbf16, #tpu.memory_space<vmem>>, vector<1x64x256xbf16>
    %62 = vector.shape_cast %61 : vector<1x64x256xbf16> to vector<64x256xbf16>
    %cst_51 = arith.constant dense<0.000000e+00> : vector<32x256xf32>
    %63 = tpu.matmul %60, %62, %cst_51 {dimension_numbers = #tpu.dot_dimension_numbers<[1], [0], [0], [1], [0, 0, 1, 1], [], []>} : vector<32x64xbf16>, vector<64x256xbf16>, vector<32x256xf32> -> vector<32x256xf32>
    %64 = vector.extract_strided_slice %63 {offsets = [0, 0], sizes = [16, 256], strides = [1, 1]} : vector<32x256xf32> to vector<16x256xf32>
    %65 = arith.truncf %64 : vector<16x256xf32> to vector<16x256xbf16>
    %c96 = arith.constant 96 : index
    %c0_52 = arith.constant 0 : index
    %66 = vector.load %arg7[%c96, %c0_52] : memref<144x512xbf16, #tpu.memory_space<vmem>>, vector<16x256xbf16>
    tpu.vector_store %arg7[%c96, %c0_52], %65 {strides = array<i32>} : memref<144x512xbf16, #tpu.memory_space<vmem>>, vector<16x256xbf16>,
    %67 = vector.extract_strided_slice %63 {offsets = [16, 0], sizes = [16, 256], strides = [1, 1]} : vector<32x256xf32> to vector<16x256xf32>
    %68 = arith.truncf %67 : vector<16x256xf32> to vector<16x256xbf16>
    %c96_53 = arith.constant 96 : index
    %c256_54 = arith.constant 256 : index
    %69 = vector.load %arg7[%c96_53, %c256_54] : memref<144x512xbf16, #tpu.memory_space<vmem>>, vector<16x256xbf16>
    tpu.vector_store %arg7[%c96_53, %c256_54], %68 {strides = array<i32>} : memref<144x512xbf16, #tpu.memory_space<vmem>>, vector<16x256xbf16>,
    %c0_55 = arith.constant 0 : index
    %c0_56 = arith.constant 0 : index
    %70 = vector.load %arg1[%c0_55, %c0_56] : memref<32x64xbf16, #tpu.memory_space<vmem>>, vector<32x64xbf16>
    %c7 = arith.constant 7 : index
    %c0_57 = arith.constant 0 : index
    %c0_58 = arith.constant 0 : index
    %71 = vector.load %arg3[%c7, %c0_57, %c0_58] : memref<9x64x256xbf16, #tpu.memory_space<vmem>>, vector<1x64x256xbf16>
    %72 = vector.shape_cast %71 : vector<1x64x256xbf16> to vector<64x256xbf16>
    %cst_59 = arith.constant dense<0.000000e+00> : vector<32x256xf32>
    %73 = tpu.matmul %70, %72, %cst_59 {dimension_numbers = #tpu.dot_dimension_numbers<[1], [0], [0], [1], [0, 0, 1, 1], [], []>} : vector<32x64xbf16>, vector<64x256xbf16>, vector<32x256xf32> -> vector<32x256xf32>
    %74 = vector.extract_strided_slice %73 {offsets = [0, 0], sizes = [16, 256], strides = [1, 1]} : vector<32x256xf32> to vector<16x256xf32>
    %75 = arith.truncf %74 : vector<16x256xf32> to vector<16x256xbf16>
    %c112 = arith.constant 112 : index
    %c0_60 = arith.constant 0 : index
    %76 = vector.load %arg7[%c112, %c0_60] : memref<144x512xbf16, #tpu.memory_space<vmem>>, vector<16x256xbf16>
    tpu.vector_store %arg7[%c112, %c0_60], %75 {strides = array<i32>} : memref<144x512xbf16, #tpu.memory_space<vmem>>, vector<16x256xbf16>,
    %77 = vector.extract_strided_slice %73 {offsets = [16, 0], sizes = [16, 256], strides = [1, 1]} : vector<32x256xf32> to vector<16x256xf32>
    %78 = arith.truncf %77 : vector<16x256xf32> to vector<16x256xbf16>
    %c112_61 = arith.constant 112 : index
    %c256_62 = arith.constant 256 : index
    %79 = vector.load %arg7[%c112_61, %c256_62] : memref<144x512xbf16, #tpu.memory_space<vmem>>, vector<16x256xbf16>
    tpu.vector_store %arg7[%c112_61, %c256_62], %78 {strides = array<i32>} : memref<144x512xbf16, #tpu.memory_space<vmem>>, vector<16x256xbf16>,
    %c0_63 = arith.constant 0 : index
    %c0_64 = arith.constant 0 : index
    %80 = vector.load %arg1[%c0_63, %c0_64] : memref<32x64xbf16, #tpu.memory_space<vmem>>, vector<32x64xbf16>
    %c8 = arith.constant 8 : index
    %c0_65 = arith.constant 0 : index
    %c0_66 = arith.constant 0 : index
    %81 = vector.load %arg3[%c8, %c0_65, %c0_66] : memref<9x64x256xbf16, #tpu.memory_space<vmem>>, vector<1x64x256xbf16>
    %82 = vector.shape_cast %81 : vector<1x64x256xbf16> to vector<64x256xbf16>
    %cst_67 = arith.constant dense<0.000000e+00> : vector<32x256xf32>
    %83 = tpu.matmul %80, %82, %cst_67 {dimension_numbers = #tpu.dot_dimension_numbers<[1], [0], [0], [1], [0, 0, 1, 1], [], []>} : vector<32x64xbf16>, vector<64x256xbf16>, vector<32x256xf32> -> vector<32x256xf32>
    %84 = vector.extract_strided_slice %83 {offsets = [0, 0], sizes = [16, 256], strides = [1, 1]} : vector<32x256xf32> to vector<16x256xf32>
    %85 = arith.truncf %84 : vector<16x256xf32> to vector<16x256xbf16>
    %c128 = arith.constant 128 : index
    %c0_68 = arith.constant 0 : index
    %86 = vector.load %arg7[%c128, %c0_68] : memref<144x512xbf16, #tpu.memory_space<vmem>>, vector<16x256xbf16>
    tpu.vector_store %arg7[%c128, %c0_68], %85 {strides = array<i32>} : memref<144x512xbf16, #tpu.memory_space<vmem>>, vector<16x256xbf16>,
    %87 = vector.extract_strided_slice %83 {offsets = [16, 0], sizes = [16, 256], strides = [1, 1]} : vector<32x256xf32> to vector<16x256xf32>
    %88 = arith.truncf %87 : vector<16x256xf32> to vector<16x256xbf16>
    %c128_69 = arith.constant 128 : index
    %c256_70 = arith.constant 256 : index
    %89 = vector.load %arg7[%c128_69, %c256_70] : memref<144x512xbf16, #tpu.memory_space<vmem>>, vector<16x256xbf16>
    tpu.vector_store %arg7[%c128_69, %c256_70], %88 {strides = array<i32>} : memref<144x512xbf16, #tpu.memory_space<vmem>>, vector<16x256xbf16>,
    %c0_71 = arith.constant 0 : index
    %c0_72 = arith.constant 0 : index
    %90 = vector.load %arg4[%c0_71, %c0_72] : memref<32x144xbf16, #tpu.memory_space<vmem>>, vector<32x144xbf16>
    %c0_73 = arith.constant 0 : index
    %c0_74 = arith.constant 0 : index
    %91 = vector.load %arg7[%c0_73, %c0_74] : memref<144x512xbf16, #tpu.memory_space<vmem>>, vector<144x512xbf16>
    %cst_75 = arith.constant dense<0.000000e+00> : vector<32x512xf32>
    %92 = tpu.matmul %90, %91, %cst_75 {dimension_numbers = #tpu.dot_dimension_numbers<[1], [0], [0], [1], [0, 0, 1, 1], [], []>} : vector<32x144xbf16>, vector<144x512xbf16>, vector<32x512xf32> -> vector<32x512xf32>
    %c0_76 = arith.constant 0 : index
    %c0_77 = arith.constant 0 : index
    %93 = vector.load %arg5[%c0_76, %c0_77] : memref<32x1xf32, #tpu.memory_space<vmem>>, vector<32x1xf32>
    %94 = vector.extract_strided_slice %92 {offsets = [0, 0], sizes = [32, 256], strides = [1, 1]} : vector<32x512xf32> to vector<32x256xf32>
    %95 = vector.broadcast %93 : vector<32x1xf32> to vector<32x256xf32>
    %96 = arith.addf %94, %95 : vector<32x256xf32>
    %cst_78 = arith.constant 0.000000e+00 : f32
    %97 = vector.broadcast %cst_78 : f32 to vector<32x256xf32>
    %98 = arith.maximumf %96, %97 : vector<32x256xf32>
    %c0_79 = arith.constant 0 : index
    %c0_80 = arith.constant 0 : index
    %c0_81 = arith.constant 0 : index
    %99 = vector.load %arg2[%c0_79, %c0_80, %c0_81] : memref<2x32x256xf32, #tpu.memory_space<vmem>>, vector<1x32x256xf32>
    %100 = vector.shape_cast %99 : vector<1x32x256xf32> to vector<32x256xf32>
    %101 = arith.addf %98, %100 : vector<32x256xf32>
    %c0_82 = arith.constant 0 : index
    %c0_83 = arith.constant 0 : index
    %c0_84 = arith.constant 0 : index
    %102 = vector.load %arg6[%c0_82, %c0_83, %c0_84] : memref<2x32x256xf32, #tpu.memory_space<vmem>>, vector<1x32x256xf32>
    %103 = vector.shape_cast %102 : vector<1x32x256xf32> to vector<32x256xf32>
    %104 = vector.shape_cast %101 : vector<32x256xf32> to vector<1x32x256xf32>
    tpu.vector_store %arg6[%c0_82, %c0_83, %c0_84], %104 {strides = array<i32>} : memref<2x32x256xf32, #tpu.memory_space<vmem>>, vector<1x32x256xf32>,
    %105 = vector.extract_strided_slice %92 {offsets = [0, 256], sizes = [32, 256], strides = [1, 1]} : vector<32x512xf32> to vector<32x256xf32>
    %106 = vector.broadcast %93 : vector<32x1xf32> to vector<32x256xf32>
    %107 = arith.addf %105, %106 : vector<32x256xf32>
    %cst_85 = arith.constant 0.000000e+00 : f32
    %108 = vector.broadcast %cst_85 : f32 to vector<32x256xf32>
    %109 = arith.maximumf %107, %108 : vector<32x256xf32>
    %c1_86 = arith.constant 1 : index
    %c0_87 = arith.constant 0 : index
    %c0_88 = arith.constant 0 : index
    %110 = vector.load %arg2[%c1_86, %c0_87, %c0_88] : memref<2x32x256xf32, #tpu.memory_space<vmem>>, vector<1x32x256xf32>
    %111 = vector.shape_cast %110 : vector<1x32x256xf32> to vector<32x256xf32>
    %112 = arith.addf %109, %111 : vector<32x256xf32>
    %c1_89 = arith.constant 1 : index
    %c0_90 = arith.constant 0 : index
    %c0_91 = arith.constant 0 : index
    %113 = vector.load %arg6[%c1_89, %c0_90, %c0_91] : memref<2x32x256xf32, #tpu.memory_space<vmem>>, vector<1x32x256xf32>
    %114 = vector.shape_cast %113 : vector<1x32x256xf32> to vector<32x256xf32>
    %115 = vector.shape_cast %112 : vector<32x256xf32> to vector<1x32x256xf32>
    tpu.vector_store %arg6[%c1_89, %c0_90, %c0_91], %115 {strides = array<i32>} : memref<2x32x256xf32, #tpu.memory_space<vmem>>, vector<1x32x256xf32>,
    return
  }
  func.func @transform_0(%arg0: i32) -> (i32, i32) {
    %c0_i32 = arith.constant 0 : i32
    %c0_i32_0 = arith.constant 0 : i32
    return %arg0, %c0_i32 : i32, i32
  }
  func.func @transform_1(%arg0: i32) -> (i32, i32, i32) {
    %c0_i32 = arith.constant 0 : i32
    %c0_i32_0 = arith.constant 0 : i32
    %c0_i32_1 = arith.constant 0 : i32
    return %arg0, %c0_i32, %c0_i32_0 : i32, i32, i32
  }
  func.func @transform_2(%arg0: i32) -> (i32, i32, i32) {
    %c0_i32 = arith.constant 0 : i32
    %c0_i32_0 = arith.constant 0 : i32
    %c0_i32_1 = arith.constant 0 : i32
    %c0_i32_2 = arith.constant 0 : i32
    return %c0_i32, %c0_i32_0, %c0_i32_1 : i32, i32, i32
  }
  func.func @transform_3(%arg0: i32) -> (i32, i32) {
    %c0_i32 = arith.constant 0 : i32
    %c0_i32_0 = arith.constant 0 : i32
    %c0_i32_1 = arith.constant 0 : i32
    return %c0_i32, %c0_i32_0 : i32, i32
  }
  func.func @transform_4(%arg0: i32) -> (i32, i32) {
    %c0_i32 = arith.constant 0 : i32
    %c0_i32_0 = arith.constant 0 : i32
    %c0_i32_1 = arith.constant 0 : i32
    return %c0_i32, %c0_i32_0 : i32, i32
  }
  func.func @transform_5(%arg0: i32) -> (i32, i32, i32) {
    %c0_i32 = arith.constant 0 : i32
    %c0_i32_0 = arith.constant 0 : i32
    %c0_i32_1 = arith.constant 0 : i32
    return %arg0, %c0_i32, %c0_i32_0 : i32, i32, i32
  }
}

</mosaic_0001>

<llo_original>
// kernel: gam_forward.1
$region0: #{gam_forward.1}
  #allocation0 [shape = 'u32[]', space=smem, size = 0x4, offset = 0x4, fixed_abs, tag = 'smem constant byte address 0x4 - core index']
  #allocation1 [shape = 'u32[144,128]{1,0:T(1,128)}', space=vmem, size = 0x12000, scoped, tag = 'internal scratch']
  #allocation2 [shape = 'bf16[144,512]{1,0:T(8,128)(2,1)}', space=vmem, size = 0x24000, scoped, tag = 'scratch operand']
  %s0 = inlined_call_operand.vmem [shape: bf16[32,64], index: 0, kind: input, shape index: {}]
  %s1 = inlined_call_operand.vmem [shape: f32[2,32,256], index: 1, kind: input, shape index: {}]
  %s2 = inlined_call_operand.vmem [shape: bf16[9,64,256], index: 2, kind: input, shape index: {}]
  %s3 = inlined_call_operand.vmem [shape: bf16[32,144], index: 3, kind: input, shape index: {}]
  %s4 = inlined_call_operand.vmem [shape: f32[32,1], index: 4, kind: input, shape index: {}]
  %s5 = inlined_call_operand.vmem [shape: f32[2,32,256], index: 5, kind: output, shape index: {}]
  %s6 = sld [smem:[#allocation0]]
  $region30: #{gam_forward.1} parent=0
    _
  %s8 = ssub.s32 1, %s6
  %s9 = scalar_select 0, %s8, %s6
  // Predicated region
  $region2: #{gam_forward.1} parent=0 // pred_check
    _
  $region3: #{gam_forward.1} parent=0 // pred_check_branch
    %11 = sbr.rel (0) target = $region5
  $region4: #{gam_forward.1} parent=0 // pred_region
    _
  $region5: #{gam_forward.1} parent=0 // pred_fallthru
    _
  // Predicated region
  $region6: #{gam_forward.1} parent=0 // pred_check
    _
  $region7: #{gam_forward.1} parent=0 // pred_check_branch
    %13 = sbr.rel (0) target = $region9
  $region8: #{gam_forward.1} parent=0 // pred_region
    _
  $region9: #{gam_forward.1} parent=0 // pred_fallthru
    _
  // Predicated region
  $region10: #{gam_forward.1} parent=0 // pred_check
    _
  $region11: #{gam_forward.1} parent=0 // pred_check_branch
    %15 = sbr.rel (0) target = $region13
  $region12: #{gam_forward.1} parent=0 // pred_region
    _
  $region13: #{gam_forward.1} parent=0 // pred_fallthru
    _
  // Predicated region
  $region14: #{gam_forward.1} parent=0 // pred_check
    _
  $region15: #{gam_forward.1} parent=0 // pred_check_branch
    %17 = sbr.rel (0) target = $region17
  $region16: #{gam_forward.1} parent=0 // pred_region
    _
  $region17: #{gam_forward.1} parent=0 // pred_fallthru
    _
  // Predicated region
  $region18: #{gam_forward.1} parent=0 // pred_check
    _
  $region19: #{gam_forward.1} parent=0 // pred_check_branch
    %19 = sbr.rel (0) target = $region21
  $region20: #{gam_forward.1} parent=0 // pred_region
    _
  $region21: #{gam_forward.1} parent=0 // pred_fallthru
    _
  %v21 = vld [vmem:[%s0] sm:$0xf]
  %v22 = vld [vmem:[%s0 + $0x4] sm:$0xf]
  %v23 = vld [vmem:[%s0 + $0x8] sm:$0xf]
  %v24 = vld [vmem:[%s0 + $0xc] sm:$0xf]
  %v25 = vld [vmem:[%s2] sm:$0xff]
  %v26 = vld [vmem:[%s2 + $0x8] sm:$0xff]
  %v27 = vld [vmem:[%s2 + $0x10] sm:$0xff]
  %v28 = vld [vmem:[%s2 + $0x18] sm:$0xff]
  %v29 = vld [vmem:[%s2 + $0x20] sm:$0xff]
  %v30 = vld [vmem:[%s2 + $0x28] sm:$0xff]
  %v31 = vld [vmem:[%s2 + $0x30] sm:$0xff]
  %v32 = vld [vmem:[%s2 + $0x38] sm:$0xff]
  %v37 = vunpack.c.l.b16 %v21
  %v38 = vunpack.c.l.b16 %v22
  %v39 = vunpack.c.l.b16 %v23
  %v40 = vunpack.c.l.b16 %v24
  %v41 = vpack.c.b16 %v38, %v37
  %v42 = vpack.c.b16 %v40, %v39
  %v51 = vunpack.c.l.b16 %v25
  %v52 = vunpack.c.h.b16 %v25
  %v53 = vunpack.c.l.b16 %v26
  %v54 = vunpack.c.h.b16 %v26
  %v55 = vunpack.c.l.b16 %v27
  %v56 = vunpack.c.h.b16 %v27
  %v57 = vunpack.c.l.b16 %v28
  %v58 = vunpack.c.h.b16 %v28
  %v59 = vunpack.c.l.b16 %v29
  %v60 = vunpack.c.h.b16 %v29
  %v61 = vunpack.c.l.b16 %v30
  %v62 = vunpack.c.h.b16 %v30
  %v63 = vunpack.c.l.b16 %v31
  %v64 = vunpack.c.h.b16 %v31
  %v65 = vunpack.c.l.b16 %v32
  %v66 = vunpack.c.h.b16 %v32
  %v67 = vpack.c.b16 %v53, %v51
  %v68 = vpack.c.b16 %v54, %v52
  %v69 = vpack.c.b16 %v57, %v55
  %v70 = vpack.c.b16 %v58, %v56
  %v71 = vpack.c.b16 %v61, %v59
  %v72 = vpack.c.b16 %v62, %v60
  %v73 = vpack.c.b16 %v65, %v63
  %v74 = vpack.c.b16 %v66, %v64
  %vm83 = vcmask 523264
  %v85 = vsel %vm83, %v41, 0
  %v88 = vsel %vm83, %v42, 0
  %90 = vmatprep.subr.bf16.mxu0 0
  %91 = vmatpush1.bf16.msra.mxu0 0
  %92 = vmatprep.subr.bf16.mxu0 0
  %93 = vmatpush1.bf16.msra.mxu0 0
  %94 = vmatprep.subr.bf16.mxu0 0
  %95 = vmatpush1.bf16.msra.mxu0 0
  %96 = vmatprep.subr.bf16.mxu0 0
  %97 = vmatpush1.bf16.msra.mxu0 0
  %98 = vmatprep.subr.bf16.mxu0 %v74
  %99 = vmatpush1.bf16.msra.mxu0 %v73
  %100 = vmatprep.subr.bf16.mxu0 %v72
  %101 = vmatpush1.bf16.msra.mxu0 %v71
  %102 = vmatprep.subr.bf16.mxu0 %v70
  %103 = vmatpush1.bf16.msra.mxu0 %v69
  %104 = vmatprep.subr.bf16.mxu0 %v68
  %105 = vmatpush1.bf16.msra.mxu0 %v67
  %106 = vmatprep.subr.bf16.mxu0 0
  %107 = vmatpush2.bf16.msra.mxu0 0
  %108 = vmatprep.subr.bf16.mxu0 0
  %109 = vmatpush2.bf16.msra.mxu0 0
  %110 = vmatprep.subr.bf16.mxu0 0
  %111 = vmatpush2.bf16.msra.mxu0 0
  %112 = vmatprep.subr.bf16.mxu0 0
  %113 = vmatpush2.bf16.msra.mxu0 0
  %114 = vmatprep.subr.bf16.mxu0 0
  %115 = vmatpush2.bf16.msra.mxu0 0
  %116 = vmatprep.subr.bf16.mxu0 0
  %117 = vmatpush2.bf16.msra.mxu0 0
  %118 = vmatprep.subr.bf16.mxu0 0
  %119 = vmatpush2.bf16.msra.mxu0 0
  %120 = vmatprep.subr.bf16.mxu0 0
  %121 = vmatpush2.bf16.msra.mxu0 0
  %122 = vmatprep.mubr.bf16.mxu0 0
  %123 = vmatmul.mubr.bf16.gmra.mxu0 %v85
  %v124 = vpop.f32.mrf.mxu0
  %v125 = vadd.f32 0.0, %v124
  %v126 = vpop.f32.mrf.mxu0
  %v127 = vadd.f32 0.0, %v126
  %v128 = vpop.f32.mrf.mxu0
  %v129 = vadd.f32 0.0, %v128
  %v130 = vpop.f32.mrf.mxu0
  %v131 = vadd.f32 0.0, %v130
  %132 = vmatprep.mubr.bf16.mxu0 0
  %133 = vmatmul.mubr.bf16.gmra.mxu0 %v88
  %v134 = vpop.f32.mrf.mxu0
  %v135 = vadd.f32 0.0, %v134
  %v136 = vpop.f32.mrf.mxu0
  %v137 = vadd.f32 0.0, %v136
  %v138 = vpop.f32.mrf.mxu0
  %v139 = vadd.f32 0.0, %v138
  %v140 = vpop.f32.mrf.mxu0
  %v141 = vadd.f32 0.0, %v140
  %142 = vdwg.mxu0
  %v143 = vpack.c.bf16 %v129, %v125
  %v144 = vpack.c.bf16 %v131, %v127
  %v147 = vunpack.c.l.b16 %v143
  %v148 = vunpack.c.l.b16 %v144
  %v149 = vunpack.c.h.b16 %v143
  %v150 = vunpack.c.h.b16 %v144
  %v151 = vpack.c.b16 %v148, %v147
  %v152 = vpack.c.b16 %v150, %v149
  %155 = vst [vmem:[#allocation2] sm:$0xff] %v151
  %156 = vst [vmem:[#allocation2 + $0x10] sm:$0xff] %v152
  %v157 = vpack.c.bf16 %v139, %v135
  %v158 = vpack.c.bf16 %v141, %v137
  %v161 = vunpack.c.l.b16 %v157
  %v162 = vunpack.c.l.b16 %v158
  %v163 = vunpack.c.h.b16 %v157
  %v164 = vunpack.c.h.b16 %v158
  %v165 = vpack.c.b16 %v162, %v161
  %v166 = vpack.c.b16 %v164, %v163
  %169 = vst [vmem:[#allocation2 + $0x8] sm:$0xff] %v165
  %170 = vst [vmem:[#allocation2 + $0x18] sm:$0xff] %v166
  %v171 = vld [vmem:[%s0] sm:$0xf]
  %v172 = vld [vmem:[%s0 + $0x4] sm:$0xf]
  %v173 = vld [vmem:[%s0 + $0x8] sm:$0xf]
  %v174 = vld [vmem:[%s0 + $0xc] sm:$0xf]
  %s175 = scalar_lea.vmem %s2, 64
  %v176 = vld [vmem:[%s175] sm:$0xff]
  %v177 = vld [vmem:[%s175 + $0x8] sm:$0xff]
  %v178 = vld [vmem:[%s175 + $0x10] sm:$0xff]
  %v179 = vld [vmem:[%s175 + $0x18] sm:$0xff]
  %v180 = vld [vmem:[%s175 + $0x20] sm:$0xff]
  %v181 = vld [vmem:[%s175 + $0x28] sm:$0xff]
  %v182 = vld [vmem:[%s175 + $0x30] sm:$0xff]
  %v183 = vld [vmem:[%s175 + $0x38] sm:$0xff]
  %v188 = vunpack.c.l.b16 %v171
  %v189 = vunpack.c.l.b16 %v172
  %v190 = vunpack.c.l.b16 %v173
  %v191 = vunpack.c.l.b16 %v174
  %v192 = vpack.c.b16 %v189, %v188
  %v193 = vpack.c.b16 %v191, %v190
  %v202 = vunpack.c.l.b16 %v176
  %v203 = vunpack.c.h.b16 %v176
  %v204 = vunpack.c.l.b16 %v177
  %v205 = vunpack.c.h.b16 %v177
  %v206 = vunpack.c.l.b16 %v178
  %v207 = vunpack.c.h.b16 %v178
  %v208 = vunpack.c.l.b16 %v179
  %v209 = vunpack.c.h.b16 %v179
  %v210 = vunpack.c.l.b16 %v180
  %v211 = vunpack.c.h.b16 %v180
  %v212 = vunpack.c.l.b16 %v181
  %v213 = vunpack.c.h.b16 %v181
  %v214 = vunpack.c.l.b16 %v182
  %v215 = vunpack.c.h.b16 %v182
  %v216 = vunpack.c.l.b16 %v183
  %v217 = vunpack.c.h.b16 %v183
  %v218 = vpack.c.b16 %v204, %v202
  %v219 = vpack.c.b16 %v205, %v203
  %v220 = vpack.c.b16 %v208, %v206
  %v221 = vpack.c.b16 %v209, %v207
  %v222 = vpack.c.b16 %v212, %v210
  %v223 = vpack.c.b16 %v213, %v211
  %v224 = vpack.c.b16 %v216, %v214
  %v225 = vpack.c.b16 %v217, %v215
  %v235 = vsel %vm83, %v192, 0
  %v238 = vsel %vm83, %v193, 0
  %240 = vmatprep.subr.bf16.mxu0 0
  %241 = vmatpush1.bf16.msra.mxu0 0
  %242 = vmatprep.subr.bf16.mxu0 0
  %243 = vmatpush1.bf16.msra.mxu0 0
  %244 = vmatprep.subr.bf16.mxu0 0
  %245 = vmatpush1.bf16.msra.mxu0 0
  %246 = vmatprep.subr.bf16.mxu0 0
  %247 = vmatpush1.bf16.msra.mxu0 0
  %248 = vmatprep.subr.bf16.mxu0 %v225
  %249 = vmatpush1.bf16.msra.mxu0 %v224
  %250 = vmatprep.subr.bf16.mxu0 %v223
  %251 = vmatpush1.bf16.msra.mxu0 %v222
  %252 = vmatprep.subr.bf16.mxu0 %v221
  %253 = vmatpush1.bf16.msra.mxu0 %v220
  %254 = vmatprep.subr.bf16.mxu0 %v219
  %255 = vmatpush1.bf16.msra.mxu0 %v218
  %256 = vmatprep.subr.bf16.mxu0 0
  %257 = vmatpush2.bf16.msra.mxu0 0
  %258 = vmatprep.subr.bf16.mxu0 0
  %259 = vmatpush2.bf16.msra.mxu0 0
  %260 = vmatprep.subr.bf16.mxu0 0
  %261 = vmatpush2.bf16.msra.mxu0 0
  %262 = vmatprep.subr.bf16.mxu0 0
  %263 = vmatpush2.bf16.msra.mxu0 0
  %264 = vmatprep.subr.bf16.mxu0 0
  %265 = vmatpush2.bf16.msra.mxu0 0
  %266 = vmatprep.subr.bf16.mxu0 0
  %267 = vmatpush2.bf16.msra.mxu0 0
  %268 = vmatprep.subr.bf16.mxu0 0
  %269 = vmatpush2.bf16.msra.mxu0 0
  %270 = vmatprep.subr.bf16.mxu0 0
  %271 = vmatpush2.bf16.msra.mxu0 0
  %272 = vmatprep.mubr.bf16.mxu0 0
  %273 = vmatmul.mubr.bf16.gmra.mxu0 %v235
  %v274 = vpop.f32.mrf.mxu0
  %v275 = vadd.f32 0.0, %v274
  %v276 = vpop.f32.mrf.mxu0
  %v277 = vadd.f32 0.0, %v276
  %v278 = vpop.f32.mrf.mxu0
  %v279 = vadd.f32 0.0, %v278
  %v280 = vpop.f32.mrf.mxu0
  %v281 = vadd.f32 0.0, %v280
  %282 = vmatprep.mubr.bf16.mxu0 0
  %283 = vmatmul.mubr.bf16.gmra.mxu0 %v238
  %v284 = vpop.f32.mrf.mxu0
  %v285 = vadd.f32 0.0, %v284
  %v286 = vpop.f32.mrf.mxu0
  %v287 = vadd.f32 0.0, %v286
  %v288 = vpop.f32.mrf.mxu0
  %v289 = vadd.f32 0.0, %v288
  %v290 = vpop.f32.mrf.mxu0
  %v291 = vadd.f32 0.0, %v290
  %292 = vdwg.mxu0
  %v293 = vpack.c.bf16 %v279, %v275
  %v294 = vpack.c.bf16 %v281, %v277
  %v297 = vunpack.c.l.b16 %v293
  %v298 = vunpack.c.l.b16 %v294
  %v299 = vunpack.c.h.b16 %v293
  %v300 = vunpack.c.h.b16 %v294
  %v301 = vpack.c.b16 %v298, %v297
  %v302 = vpack.c.b16 %v300, %v299
  %305 = vst [vmem:[#allocation2 + $0x20] sm:$0xff] %v301
  %306 = vst [vmem:[#allocation2 + $0x30] sm:$0xff] %v302
  %v307 = vpack.c.bf16 %v289, %v285
  %v308 = vpack.c.bf16 %v291, %v287
  %v311 = vunpack.c.l.b16 %v307
  %v312 = vunpack.c.l.b16 %v308
  %v313 = vunpack.c.h.b16 %v307
  %v314 = vunpack.c.h.b16 %v308
  %v315 = vpack.c.b16 %v312, %v311
  %v316 = vpack.c.b16 %v314, %v313
  %319 = vst [vmem:[#allocation2 + $0x28] sm:$0xff] %v315
  %320 = vst [vmem:[#allocation2 + $0x38] sm:$0xff] %v316
  %v321 = vld [vmem:[%s0] sm:$0xf]
  %v322 = vld [vmem:[%s0 + $0x4] sm:$0xf]
  %v323 = vld [vmem:[%s0 + $0x8] sm:$0xf]
  %v324 = vld [vmem:[%s0 + $0xc] sm:$0xf]
  %s325 = scalar_lea.vmem %s2, 128
  %v326 = vld [vmem:[%s325] sm:$0xff]
  %v327 = vld [vmem:[%s325 + $0x8] sm:$0xff]
  %v328 = vld [vmem:[%s325 + $0x10] sm:$0xff]
  %v329 = vld [vmem:[%s325 + $0x18] sm:$0xff]
  %v330 = vld [vmem:[%s325 + $0x20] sm:$0xff]
  %v331 = vld [vmem:[%s325 + $0x28] sm:$0xff]
  %v332 = vld [vmem:[%s325 + $0x30] sm:$0xff]
  %v333 = vld [vmem:[%s325 + $0x38] sm:$0xff]
  %v338 = vunpack.c.l.b16 %v321
  %v339 = vunpack.c.l.b16 %v322
  %v340 = vunpack.c.l.b16 %v323
  %v341 = vunpack.c.l.b16 %v324
  %v342 = vpack.c.b16 %v339, %v338
  %v343 = vpack.c.b16 %v341, %v340
  %v352 = vunpack.c.l.b16 %v326
  %v353 = vunpack.c.h.b16 %v326
  %v354 = vunpack.c.l.b16 %v327
  %v355 = vunpack.c.h.b16 %v327
  %v356 = vunpack.c.l.b16 %v328
  %v357 = vunpack.c.h.b16 %v328
  %v358 = vunpack.c.l.b16 %v329
  %v359 = vunpack.c.h.b16 %v329
  %v360 = vunpack.c.l.b16 %v330
  %v361 = vunpack.c.h.b16 %v330
  %v362 = vunpack.c.l.b16 %v331
  %v363 = vunpack.c.h.b16 %v331
  %v364 = vunpack.c.l.b16 %v332
  %v365 = vunpack.c.h.b16 %v332
  %v366 = vunpack.c.l.b16 %v333
  %v367 = vunpack.c.h.b16 %v333
  %v368 = vpack.c.b16 %v354, %v352
  %v369 = vpack.c.b16 %v355, %v353
  %v370 = vpack.c.b16 %v358, %v356
  %v371 = vpack.c.b16 %v359, %v357
  %v372 = vpack.c.b16 %v362, %v360
  %v373 = vpack.c.b16 %v363, %v361
  %v374 = vpack.c.b16 %v366, %v364
  %v375 = vpack.c.b16 %v367, %v365
  %v385 = vsel %vm83, %v342, 0
  %v388 = vsel %vm83, %v343, 0
  %390 = vmatprep.subr.bf16.mxu0 0
  %391 = vmatpush1.bf16.msra.mxu0 0
  %392 = vmatprep.subr.bf16.mxu0 0
  %393 = vmatpush1.bf16.msra.mxu0 0
  %394 = vmatprep.subr.bf16.mxu0 0
  %395 = vmatpush1.bf16.msra.mxu0 0
  %396 = vmatprep.subr.bf16.mxu0 0
  %397 = vmatpush1.bf16.msra.mxu0 0
  %398 = vmatprep.subr.bf16.mxu0 %v375
  %399 = vmatpush1.bf16.msra.mxu0 %v374
  %400 = vmatprep.subr.bf16.mxu0 %v373
  %401 = vmatpush1.bf16.msra.mxu0 %v372
  %402 = vmatprep.subr.bf16.mxu0 %v371
  %403 = vmatpush1.bf16.msra.mxu0 %v370
  %404 = vmatprep.subr.bf16.mxu0 %v369
  %405 = vmatpush1.bf16.msra.mxu0 %v368
  %406 = vmatprep.subr.bf16.mxu0 0
  %407 = vmatpush2.bf16.msra.mxu0 0
  %408 = vmatprep.subr.bf16.mxu0 0
  %409 = vmatpush2.bf16.msra.mxu0 0
  %410 = vmatprep.subr.bf16.mxu0 0
  %411 = vmatpush2.bf16.msra.mxu0 0
  %412 = vmatprep.subr.bf16.mxu0 0
  %413 = vmatpush2.bf16.msra.mxu0 0
  %414 = vmatprep.subr.bf16.mxu0 0
  %415 = vmatpush2.bf16.msra.mxu0 0
  %416 = vmatprep.subr.bf16.mxu0 0
  %417 = vmatpush2.bf16.msra.mxu0 0
  %418 = vmatprep.subr.bf16.mxu0 0
  %419 = vmatpush2.bf16.msra.mxu0 0
  %420 = vmatprep.subr.bf16.mxu0 0
  %421 = vmatpush2.bf16.msra.mxu0 0
  %422 = vmatprep.mubr.bf16.mxu0 0
  %423 = vmatmul.mubr.bf16.gmra.mxu0 %v385
  %v424 = vpop.f32.mrf.mxu0
  %v425 = vadd.f32 0.0, %v424
  %v426 = vpop.f32.mrf.mxu0
  %v427 = vadd.f32 0.0, %v426
  %v428 = vpop.f32.mrf.mxu0
  %v429 = vadd.f32 0.0, %v428
  %v430 = vpop.f32.mrf.mxu0
  %v431 = vadd.f32 0.0, %v430
  %432 = vmatprep.mubr.bf16.mxu0 0
  %433 = vmatmul.mubr.bf16.gmra.mxu0 %v388
  %v434 = vpop.f32.mrf.mxu0
  %v435 = vadd.f32 0.0, %v434
  %v436 = vpop.f32.mrf.mxu0
  %v437 = vadd.f32 0.0, %v436
  %v438 = vpop.f32.mrf.mxu0
  %v439 = vadd.f32 0.0, %v438
  %v440 = vpop.f32.mrf.mxu0
  %v441 = vadd.f32 0.0, %v440
  %442 = vdwg.mxu0
  %v443 = vpack.c.bf16 %v429, %v425
  %v444 = vpack.c.bf16 %v431, %v427
  %v447 = vunpack.c.l.b16 %v443
  %v448 = vunpack.c.l.b16 %v444
  %v449 = vunpack.c.h.b16 %v443
  %v450 = vunpack.c.h.b16 %v444
  %v451 = vpack.c.b16 %v448, %v447
  %v452 = vpack.c.b16 %v450, %v449
  %455 = vst [vmem:[#allocation2 + $0x40] sm:$0xff] %v451
  %456 = vst [vmem:[#allocation2 + $0x50] sm:$0xff] %v452
  %v457 = vpack.c.bf16 %v439, %v435
  %v458 = vpack.c.bf16 %v441, %v437
  %v461 = vunpack.c.l.b16 %v457
  %v462 = vunpack.c.l.b16 %v458
  %v463 = vunpack.c.h.b16 %v457
  %v464 = vunpack.c.h.b16 %v458
  %v465 = vpack.c.b16 %v462, %v461
  %v466 = vpack.c.b16 %v464, %v463
  %469 = vst [vmem:[#allocation2 + $0x48] sm:$0xff] %v465
  %470 = vst [vmem:[#allocation2 + $0x58] sm:$0xff] %v466
  %v471 = vld [vmem:[%s0] sm:$0xf]
  %v472 = vld [vmem:[%s0 + $0x4] sm:$0xf]
  %v473 = vld [vmem:[%s0 + $0x8] sm:$0xf]
  %v474 = vld [vmem:[%s0 + $0xc] sm:$0xf]
  %s475 = scalar_lea.vmem %s2, 192
  %v476 = vld [vmem:[%s475] sm:$0xff]
  %v477 = vld [vmem:[%s475 + $0x8] sm:$0xff]
  %v478 = vld [vmem:[%s475 + $0x10] sm:$0xff]
  %v479 = vld [vmem:[%s475 + $0x18] sm:$0xff]
  %v480 = vld [vmem:[%s475 + $0x20] sm:$0xff]
  %v481 = vld [vmem:[%s475 + $0x28] sm:$0xff]
  %v482 = vld [vmem:[%s475 + $0x30] sm:$0xff]
  %v483 = vld [vmem:[%s475 + $0x38] sm:$0xff]
  %v488 = vunpack.c.l.b16 %v471
  %v489 = vunpack.c.l.b16 %v472
  %v490 = vunpack.c.l.b16 %v473
  %v491 = vunpack.c.l.b16 %v474
  %v492 = vpack.c.b16 %v489, %v488
  %v493 = vpack.c.b16 %v491, %v490
  %v502 = vunpack.c.l.b16 %v476
  %v503 = vunpack.c.h.b16 %v476
  %v504 = vunpack.c.l.b16 %v477
  %v505 = vunpack.c.h.b16 %v477
  %v506 = vunpack.c.l.b16 %v478
  %v507 = vunpack.c.h.b16 %v478
  %v508 = vunpack.c.l.b16 %v479
  %v509 = vunpack.c.h.b16 %v479
  %v510 = vunpack.c.l.b16 %v480
  %v511 = vunpack.c.h.b16 %v480
  %v512 = vunpack.c.l.b16 %v481
  %v513 = vunpack.c.h.b16 %v481
  %v514 = vunpack.c.l.b16 %v482
  %v515 = vunpack.c.h.b16 %v482
  %v516 = vunpack.c.l.b16 %v483
  %v517 = vunpack.c.h.b16 %v483
  %v518 = vpack.c.b16 %v504, %v502
  %v519 = vpack.c.b16 %v505, %v503
  %v520 = vpack.c.b16 %v508, %v506
  %v521 = vpack.c.b16 %v509, %v507
  %v522 = vpack.c.b16 %v512, %v510
  %v523 = vpack.c.b16 %v513, %v511
  %v524 = vpack.c.b16 %v516, %v514
  %v525 = vpack.c.b16 %v517, %v515
  %v535 = vsel %vm83, %v492, 0
  %v538 = vsel %vm83, %v493, 0
  %540 = vmatprep.subr.bf16.mxu0 0
  %541 = vmatpush1.bf16.msra.mxu0 0
  %542 = vmatprep.subr.bf16.mxu0 0
  %543 = vmatpush1.bf16.msra.mxu0 0
  %544 = vmatprep.subr.bf16.mxu0 0
  %545 = vmatpush1.bf16.msra.mxu0 0
  %546 = vmatprep.subr.bf16.mxu0 0
  %547 = vmatpush1.bf16.msra.mxu0 0
  %548 = vmatprep.subr.bf16.mxu0 %v525
  %549 = vmatpush1.bf16.msra.mxu0 %v524
  %550 = vmatprep.subr.bf16.mxu0 %v523
  %551 = vmatpush1.bf16.msra.mxu0 %v522
  %552 = vmatprep.subr.bf16.mxu0 %v521
  %553 = vmatpush1.bf16.msra.mxu0 %v520
  %554 = vmatprep.subr.bf16.mxu0 %v519
  %555 = vmatpush1.bf16.msra.mxu0 %v518
  %556 = vmatprep.subr.bf16.mxu0 0
  %557 = vmatpush2.bf16.msra.mxu0 0
  %558 = vmatprep.subr.bf16.mxu0 0
  %559 = vmatpush2.bf16.msra.mxu0 0
  %560 = vmatprep.subr.bf16.mxu0 0
  %561 = vmatpush2.bf16.msra.mxu0 0
  %562 = vmatprep.subr.bf16.mxu0 0
  %563 = vmatpush2.bf16.msra.mxu0 0
  %564 = vmatprep.subr.bf16.mxu0 0
  %565 = vmatpush2.bf16.msra.mxu0 0
  %566 = vmatprep.subr.bf16.mxu0 0
  %567 = vmatpush2.bf16.msra.mxu0 0
  %568 = vmatprep.subr.bf16.mxu0 0
  %569 = vmatpush2.bf16.msra.mxu0 0
  %570 = vmatprep.subr.bf16.mxu0 0
  %571 = vmatpush2.bf16.msra.mxu0 0
  %572 = vmatprep.mubr.bf16.mxu0 0
  %573 = vmatmul.mubr.bf16.gmra.mxu0 %v535
  %v574 = vpop.f32.mrf.mxu0
  %v575 = vadd.f32 0.0, %v574
  %v576 = vpop.f32.mrf.mxu0
  %v577 = vadd.f32 0.0, %v576
  %v578 = vpop.f32.mrf.mxu0
  %v579 = vadd.f32 0.0, %v578
  %v580 = vpop.f32.mrf.mxu0
  %v581 = vadd.f32 0.0, %v580
  %582 = vmatprep.mubr.bf16.mxu0 0
  %583 = vmatmul.mubr.bf16.gmra.mxu0 %v538
  %v584 = vpop.f32.mrf.mxu0
  %v585 = vadd.f32 0.0, %v584
  %v586 = vpop.f32.mrf.mxu0
  %v587 = vadd.f32 0.0, %v586
  %v588 = vpop.f32.mrf.mxu0
  %v589 = vadd.f32 0.0, %v588
  %v590 = vpop.f32.mrf.mxu0
  %v591 = vadd.f32 0.0, %v590
  %592 = vdwg.mxu0
  %v593 = vpack.c.bf16 %v579, %v575
  %v594 = vpack.c.bf16 %v581, %v577
  %v597 = vunpack.c.l.b16 %v593
  %v598 = vunpack.c.l.b16 %v594
  %v599 = vunpack.c.h.b16 %v593
  %v600 = vunpack.c.h.b16 %v594
  %v601 = vpack.c.b16 %v598, %v597
  %v602 = vpack.c.b16 %v600, %v599
  %605 = vst [vmem:[#allocation2 + $0x60] sm:$0xff] %v601
  %606 = vst [vmem:[#allocation2 + $0x70] sm:$0xff] %v602
  %v607 = vpack.c.bf16 %v589, %v585
  %v608 = vpack.c.bf16 %v591, %v587
  %v611 = vunpack.c.l.b16 %v607
  %v612 = vunpack.c.l.b16 %v608
  %v613 = vunpack.c.h.b16 %v607
  %v614 = vunpack.c.h.b16 %v608
  %v615 = vpack.c.b16 %v612, %v611
  %v616 = vpack.c.b16 %v614, %v613
  %619 = vst [vmem:[#allocation2 + $0x68] sm:$0xff] %v615
  %620 = vst [vmem:[#allocation2 + $0x78] sm:$0xff] %v616
  %v621 = vld [vmem:[%s0] sm:$0xf]
  %v622 = vld [vmem:[%s0 + $0x4] sm:$0xf]
  %v623 = vld [vmem:[%s0 + $0x8] sm:$0xf]
  %v624 = vld [vmem:[%s0 + $0xc] sm:$0xf]
  %s625 = scalar_lea.vmem %s2, 256
  %v626 = vld [vmem:[%s625] sm:$0xff]
  %v627 = vld [vmem:[%s625 + $0x8] sm:$0xff]
  %v628 = vld [vmem:[%s625 + $0x10] sm:$0xff]
  %v629 = vld [vmem:[%s625 + $0x18] sm:$0xff]
  %v630 = vld [vmem:[%s625 + $0x20] sm:$0xff]
  %v631 = vld [vmem:[%s625 + $0x28] sm:$0xff]
  %v632 = vld [vmem:[%s625 + $0x30] sm:$0xff]
  %v633 = vld [vmem:[%s625 + $0x38] sm:$0xff]
  %v638 = vunpack.c.l.b16 %v621
  %v639 = vunpack.c.l.b16 %v622
  %v640 = vunpack.c.l.b16 %v623
  %v641 = vunpack.c.l.b16 %v624
  %v642 = vpack.c.b16 %v639, %v638
  %v643 = vpack.c.b16 %v641, %v640
  %v652 = vunpack.c.l.b16 %v626
  %v653 = vunpack.c.h.b16 %v626
  %v654 = vunpack.c.l.b16 %v627
  %v655 = vunpack.c.h.b16 %v627
  %v656 = vunpack.c.l.b16 %v628
  %v657 = vunpack.c.h.b16 %v628
  %v658 = vunpack.c.l.b16 %v629
  %v659 = vunpack.c.h.b16 %v629
  %v660 = vunpack.c.l.b16 %v630
  %v661 = vunpack.c.h.b16 %v630
  %v662 = vunpack.c.l.b16 %v631
  %v663 = vunpack.c.h.b16 %v631
  %v664 = vunpack.c.l.b16 %v632
  %v665 = vunpack.c.h.b16 %v632
  %v666 = vunpack.c.l.b16 %v633
  %v667 = vunpack.c.h.b16 %v633
  %v668 = vpack.c.b16 %v654, %v652
  %v669 = vpack.c.b16 %v655, %v653
  %v670 = vpack.c.b16 %v658, %v656
  %v671 = vpack.c.b16 %v659, %v657
  %v672 = vpack.c.b16 %v662, %v660
  %v673 = vpack.c.b16 %v663, %v661
  %v674 = vpack.c.b16 %v666, %v664
  %v675 = vpack.c.b16 %v667, %v665
  %v685 = vsel %vm83, %v642, 0
  %v688 = vsel %vm83, %v643, 0
  %690 = vmatprep.subr.bf16.mxu0 0
  %691 = vmatpush1.bf16.msra.mxu0 0
  %692 = vmatprep.subr.bf16.mxu0 0
  %693 = vmatpush1.bf16.msra.mxu0 0
  %694 = vmatprep.subr.bf16.mxu0 0
  %695 = vmatpush1.bf16.msra.mxu0 0
  %696 = vmatprep.subr.bf16.mxu0 0
  %697 = vmatpush1.bf16.msra.mxu0 0
  %698 = vmatprep.subr.bf16.mxu0 %v675
  %699 = vmatpush1.bf16.msra.mxu0 %v674
  %700 = vmatprep.subr.bf16.mxu0 %v673
  %701 = vmatpush1.bf16.msra.mxu0 %v672
  %702 = vmatprep.subr.bf16.mxu0 %v671
  %703 = vmatpush1.bf16.msra.mxu0 %v670
  %704 = vmatprep.subr.bf16.mxu0 %v669
  %705 = vmatpush1.bf16.msra.mxu0 %v668
  %706 = vmatprep.subr.bf16.mxu0 0
  %707 = vmatpush2.bf16.msra.mxu0 0
  %708 = vmatprep.subr.bf16.mxu0 0
  %709 = vmatpush2.bf16.msra.mxu0 0
  %710 = vmatprep.subr.bf16.mxu0 0
  %711 = vmatpush2.bf16.msra.mxu0 0
  %712 = vmatprep.subr.bf16.mxu0 0
  %713 = vmatpush2.bf16.msra.mxu0 0
  %714 = vmatprep.subr.bf16.mxu0 0
  %715 = vmatpush2.bf16.msra.mxu0 0
  %716 = vmatprep.subr.bf16.mxu0 0
  %717 = vmatpush2.bf16.msra.mxu0 0
  %718 = vmatprep.subr.bf16.mxu0 0
  %719 = vmatpush2.bf16.msra.mxu0 0
  %720 = vmatprep.subr.bf16.mxu0 0
  %721 = vmatpush2.bf16.msra.mxu0 0
  %722 = vmatprep.mubr.bf16.mxu0 0
  %723 = vmatmul.mubr.bf16.gmra.mxu0 %v685
  %v724 = vpop.f32.mrf.mxu0
  %v725 = vadd.f32 0.0, %v724
  %v726 = vpop.f32.mrf.mxu0
  %v727 = vadd.f32 0.0, %v726
  %v728 = vpop.f32.mrf.mxu0
  %v729 = vadd.f32 0.0, %v728
  %v730 = vpop.f32.mrf.mxu0
  %v731 = vadd.f32 0.0, %v730
  %732 = vmatprep.mubr.bf16.mxu0 0
  %733 = vmatmul.mubr.bf16.gmra.mxu0 %v688
  %v734 = vpop.f32.mrf.mxu0
  %v735 = vadd.f32 0.0, %v734
  %v736 = vpop.f32.mrf.mxu0
  %v737 = vadd.f32 0.0, %v736
  %v738 = vpop.f32.mrf.mxu0
  %v739 = vadd.f32 0.0, %v738
  %v740 = vpop.f32.mrf.mxu0
  %v741 = vadd.f32 0.0, %v740
  %742 = vdwg.mxu0
  %v743 = vpack.c.bf16 %v729, %v725
  %v744 = vpack.c.bf16 %v731, %v727
  %v747 = vunpack.c.l.b16 %v743
  %v748 = vunpack.c.l.b16 %v744
  %v749 = vunpack.c.h.b16 %v743
  %v750 = vunpack.c.h.b16 %v744
  %v751 = vpack.c.b16 %v748, %v747
  %v752 = vpack.c.b16 %v750, %v749
  %755 = vst [vmem:[#allocation2 + $0x80] sm:$0xff] %v751
  %756 = vst [vmem:[#allocation2 + $0x90] sm:$0xff] %v752
  %v757 = vpack.c.bf16 %v739, %v735
  %v758 = vpack.c.bf16 %v741, %v737
  %v761 = vunpack.c.l.b16 %v757
  %v762 = vunpack.c.l.b16 %v758
  %v763 = vunpack.c.h.b16 %v757
  %v764 = vunpack.c.h.b16 %v758
  %v765 = vpack.c.b16 %v762, %v761
  %v766 = vpack.c.b16 %v764, %v763
  %769 = vst [vmem:[#allocation2 + $0x88] sm:$0xff] %v765
  %770 = vst [vmem:[#allocation2 + $0x98] sm:$0xff] %v766
  %v771 = vld [vmem:[%s0] sm:$0xf]
  %v772 = vld [vmem:[%s0 + $0x4] sm:$0xf]
  %v773 = vld [vmem:[%s0 + $0x8] sm:$0xf]
  %v774 = vld [vmem:[%s0 + $0xc] sm:$0xf]
  %s775 = scalar_lea.vmem %s2, 320
  %v776 = vld [vmem:[%s775] sm:$0xff]
  %v777 = vld [vmem:[%s775 + $0x8] sm:$0xff]
  %v778 = vld [vmem:[%s775 + $0x10] sm:$0xff]
  %v779 = vld [vmem:[%s775 + $0x18] sm:$0xff]
  %v780 = vld [vmem:[%s775 + $0x20] sm:$0xff]
  %v781 = vld [vmem:[%s775 + $0x28] sm:$0xff]
  %v782 = vld [vmem:[%s775 + $0x30] sm:$0xff]
  %v783 = vld [vmem:[%s775 + $0x38] sm:$0xff]
  %v788 = vunpack.c.l.b16 %v771
  %v789 = vunpack.c.l.b16 %v772
  %v790 = vunpack.c.l.b16 %v773
  %v791 = vunpack.c.l.b16 %v774
  %v792 = vpack.c.b16 %v789, %v788
  %v793 = vpack.c.b16 %v791, %v790
  %v802 = vunpack.c.l.b16 %v776
  %v803 = vunpack.c.h.b16 %v776
  %v804 = vunpack.c.l.b16 %v777
  %v805 = vunpack.c.h.b16 %v777
  %v806 = vunpack.c.l.b16 %v778
  %v807 = vunpack.c.h.b16 %v778
  %v808 = vunpack.c.l.b16 %v779
  %v809 = vunpack.c.h.b16 %v779
  %v810 = vunpack.c.l.b16 %v780
  %v811 = vunpack.c.h.b16 %v780
  %v812 = vunpack.c.l.b16 %v781
  %v813 = vunpack.c.h.b16 %v781
  %v814 = vunpack.c.l.b16 %v782
  %v815 = vunpack.c.h.b16 %v782
  %v816 = vunpack.c.l.b16 %v783
  %v817 = vunpack.c.h.b16 %v783
  %v818 = vpack.c.b16 %v804, %v802
  %v819 = vpack.c.b16 %v805, %v803
  %v820 = vpack.c.b16 %v808, %v806
  %v821 = vpack.c.b16 %v809, %v807
  %v822 = vpack.c.b16 %v812, %v810
  %v823 = vpack.c.b16 %v813, %v811
  %v824 = vpack.c.b16 %v816, %v814
  %v825 = vpack.c.b16 %v817, %v815
  %v835 = vsel %vm83, %v792, 0
  %v838 = vsel %vm83, %v793, 0
  %840 = vmatprep.subr.bf16.mxu0 0
  %841 = vmatpush1.bf16.msra.mxu0 0
  %842 = vmatprep.subr.bf16.mxu0 0
  %843 = vmatpush1.bf16.msra.mxu0 0
  %844 = vmatprep.subr.bf16.mxu0 0
  %845 = vmatpush1.bf16.msra.mxu0 0
  %846 = vmatprep.subr.bf16.mxu0 0
  %847 = vmatpush1.bf16.msra.mxu0 0
  %848 = vmatprep.subr.bf16.mxu0 %v825
  %849 = vmatpush1.bf16.msra.mxu0 %v824
  %850 = vmatprep.subr.bf16.mxu0 %v823
  %851 = vmatpush1.bf16.msra.mxu0 %v822
  %852 = vmatprep.subr.bf16.mxu0 %v821
  %853 = vmatpush1.bf16.msra.mxu0 %v820
  %854 = vmatprep.subr.bf16.mxu0 %v819
  %855 = vmatpush1.bf16.msra.mxu0 %v818
  %856 = vmatprep.subr.bf16.mxu0 0
  %857 = vmatpush2.bf16.msra.mxu0 0
  %858 = vmatprep.subr.bf16.mxu0 0
  %859 = vmatpush2.bf16.msra.mxu0 0
  %860 = vmatprep.subr.bf16.mxu0 0
  %861 = vmatpush2.bf16.msra.mxu0 0
  %862 = vmatprep.subr.bf16.mxu0 0
  %863 = vmatpush2.bf16.msra.mxu0 0
  %864 = vmatprep.subr.bf16.mxu0 0
  %865 = vmatpush2.bf16.msra.mxu0 0
  %866 = vmatprep.subr.bf16.mxu0 0
  %867 = vmatpush2.bf16.msra.mxu0 0
  %868 = vmatprep.subr.bf16.mxu0 0
  %869 = vmatpush2.bf16.msra.mxu0 0
  %870 = vmatprep.subr.bf16.mxu0 0
  %871 = vmatpush2.bf16.msra.mxu0 0
  %872 = vmatprep.mubr.bf16.mxu0 0
  %873 = vmatmul.mubr.bf16.gmra.mxu0 %v835
  %v874 = vpop.f32.mrf.mxu0
  %v875 = vadd.f32 0.0, %v874
  %v876 = vpop.f32.mrf.mxu0
  %v877 = vadd.f32 0.0, %v876
  %v878 = vpop.f32.mrf.mxu0
  %v879 = vadd.f32 0.0, %v878
  %v880 = vpop.f32.mrf.mxu0
  %v881 = vadd.f32 0.0, %v880
  %882 = vmatprep.mubr.bf16.mxu0 0
  %883 = vmatmul.mubr.bf16.gmra.mxu0 %v838
  %v884 = vpop.f32.mrf.mxu0
  %v885 = vadd.f32 0.0, %v884
  %v886 = vpop.f32.mrf.mxu0
  %v887 = vadd.f32 0.0, %v886
  %v888 = vpop.f32.mrf.mxu0
  %v889 = vadd.f32 0.0, %v888
  %v890 = vpop.f32.mrf.mxu0
  %v891 = vadd.f32 0.0, %v890
  %892 = vdwg.mxu0
  %v893 = vpack.c.bf16 %v879, %v875
  %v894 = vpack.c.bf16 %v881, %v877
  %v897 = vunpack.c.l.b16 %v893
  %v898 = vunpack.c.l.b16 %v894
  %v899 = vunpack.c.h.b16 %v893
  %v900 = vunpack.c.h.b16 %v894
  %v901 = vpack.c.b16 %v898, %v897
  %v902 = vpack.c.b16 %v900, %v899
  %905 = vst [vmem:[#allocation2 + $0xa0] sm:$0xff] %v901
  %906 = vst [vmem:[#allocation2 + $0xb0] sm:$0xff] %v902
  %v907 = vpack.c.bf16 %v889, %v885
  %v908 = vpack.c.bf16 %v891, %v887
  %v911 = vunpack.c.l.b16 %v907
  %v912 = vunpack.c.l.b16 %v908
  %v913 = vunpack.c.h.b16 %v907
  %v914 = vunpack.c.h.b16 %v908
  %v915 = vpack.c.b16 %v912, %v911
  %v916 = vpack.c.b16 %v914, %v913
  %919 = vst [vmem:[#allocation2 + $0xa8] sm:$0xff] %v915
  %920 = vst [vmem:[#allocation2 + $0xb8] sm:$0xff] %v916
  %v921 = vld [vmem:[%s0] sm:$0xf]
  %v922 = vld [vmem:[%s0 + $0x4] sm:$0xf]
  %v923 = vld [vmem:[%s0 + $0x8] sm:$0xf]
  %v924 = vld [vmem:[%s0 + $0xc] sm:$0xf]
  %s925 = scalar_lea.vmem %s2, 384
  %v926 = vld [vmem:[%s925] sm:$0xff]
  %v927 = vld [vmem:[%s925 + $0x8] sm:$0xff]
  %v928 = vld [vmem:[%s925 + $0x10] sm:$0xff]
  %v929 = vld [vmem:[%s925 + $0x18] sm:$0xff]
  %v930 = vld [vmem:[%s925 + $0x20] sm:$0xff]
  %v931 = vld [vmem:[%s925 + $0x28] sm:$0xff]
  %v932 = vld [vmem:[%s925 + $0x30] sm:$0xff]
  %v933 = vld [vmem:[%s925 + $0x38] sm:$0xff]
  %v938 = vunpack.c.l.b16 %v921
  %v939 = vunpack.c.l.b16 %v922
  %v940 = vunpack.c.l.b16 %v923
  %v941 = vunpack.c.l.b16 %v924
  %v942 = vpack.c.b16 %v939, %v938
  %v943 = vpack.c.b16 %v941, %v940
  %v952 = vunpack.c.l.b16 %v926
  %v953 = vunpack.c.h.b16 %v926
  %v954 = vunpack.c.l.b16 %v927
  %v955 = vunpack.c.h.b16 %v927
  %v956 = vunpack.c.l.b16 %v928
  %v957 = vunpack.c.h.b16 %v928
  %v958 = vunpack.c.l.b16 %v929
  %v959 = vunpack.c.h.b16 %v929
  %v960 = vunpack.c.l.b16 %v930
  %v961 = vunpack.c.h.b16 %v930
  %v962 = vunpack.c.l.b16 %v931
  %v963 = vunpack.c.h.b16 %v931
  %v964 = vunpack.c.l.b16 %v932
  %v965 = vunpack.c.h.b16 %v932
  %v966 = vunpack.c.l.b16 %v933
  %v967 = vunpack.c.h.b16 %v933
  %v968 = vpack.c.b16 %v954, %v952
  %v969 = vpack.c.b16 %v955, %v953
  %v970 = vpack.c.b16 %v958, %v956
  %v971 = vpack.c.b16 %v959, %v957
  %v972 = vpack.c.b16 %v962, %v960
  %v973 = vpack.c.b16 %v963, %v961
  %v974 = vpack.c.b16 %v966, %v964
  %v975 = vpack.c.b16 %v967, %v965
  %v985 = vsel %vm83, %v942, 0
  %v988 = vsel %vm83, %v943, 0
  %990 = vmatprep.subr.bf16.mxu0 0
  %991 = vmatpush1.bf16.msra.mxu0 0
  %992 = vmatprep.subr.bf16.mxu0 0
  %993 = vmatpush1.bf16.msra.mxu0 0
  %994 = vmatprep.subr.bf16.mxu0 0
  %995 = vmatpush1.bf16.msra.mxu0 0
  %996 = vmatprep.subr.bf16.mxu0 0
  %997 = vmatpush1.bf16.msra.mxu0 0
  %998 = vmatprep.subr.bf16.mxu0 %v975
  %999 = vmatpush1.bf16.msra.mxu0 %v974
  %1000 = vmatprep.subr.bf16.mxu0 %v973
  %1001 = vmatpush1.bf16.msra.mxu0 %v972
  %1002 = vmatprep.subr.bf16.mxu0 %v971
  %1003 = vmatpush1.bf16.msra.mxu0 %v970
  %1004 = vmatprep.subr.bf16.mxu0 %v969
  %1005 = vmatpush1.bf16.msra.mxu0 %v968
  %1006 = vmatprep.subr.bf16.mxu0 0
  %1007 = vmatpush2.bf16.msra.mxu0 0
  %1008 = vmatprep.subr.bf16.mxu0 0
  %1009 = vmatpush2.bf16.msra.mxu0 0
  %1010 = vmatprep.subr.bf16.mxu0 0
  %1011 = vmatpush2.bf16.msra.mxu0 0
  %1012 = vmatprep.subr.bf16.mxu0 0
  %1013 = vmatpush2.bf16.msra.mxu0 0
  %1014 = vmatprep.subr.bf16.mxu0 0
  %1015 = vmatpush2.bf16.msra.mxu0 0
  %1016 = vmatprep.subr.bf16.mxu0 0
  %1017 = vmatpush2.bf16.msra.mxu0 0
  %1018 = vmatprep.subr.bf16.mxu0 0
  %1019 = vmatpush2.bf16.msra.mxu0 0
  %1020 = vmatprep.subr.bf16.mxu0 0
  %1021 = vmatpush2.bf16.msra.mxu0 0
  %1022 = vmatprep.mubr.bf16.mxu0 0
  %1023 = vmatmul.mubr.bf16.gmra.mxu0 %v985
  %v1024 = vpop.f32.mrf.mxu0
  %v1025 = vadd.f32 0.0, %v1024
  %v1026 = vpop.f32.mrf.mxu0
  %v1027 = vadd.f32 0.0, %v1026
  %v1028 = vpop.f32.mrf.mxu0
  %v1029 = vadd.f32 0.0, %v1028
  %v1030 = vpop.f32.mrf.mxu0
  %v1031 = vadd.f32 0.0, %v1030
  %1032 = vmatprep.mubr.bf16.mxu0 0
  %1033 = vmatmul.mubr.bf16.gmra.mxu0 %v988
  %v1034 = vpop.f32.mrf.mxu0
  %v1035 = vadd.f32 0.0, %v1034
  %v1036 = vpop.f32.mrf.mxu0
  %v1037 = vadd.f32 0.0, %v1036
  %v1038 = vpop.f32.mrf.mxu0
  %v1039 = vadd.f32 0.0, %v1038
  %v1040 = vpop.f32.mrf.mxu0
  %v1041 = vadd.f32 0.0, %v1040
  %1042 = vdwg.mxu0
  %v1043 = vpack.c.bf16 %v1029, %v1025
  %v1044 = vpack.c.bf16 %v1031, %v1027
  %v1047 = vunpack.c.l.b16 %v1043
  %v1048 = vunpack.c.l.b16 %v1044
  %v1049 = vunpack.c.h.b16 %v1043
  %v1050 = vunpack.c.h.b16 %v1044
  %v1051 = vpack.c.b16 %v1048, %v1047
  %v1052 = vpack.c.b16 %v1050, %v1049
  %1055 = vst [vmem:[#allocation2 + $0xc0] sm:$0xff] %v1051
  %1056 = vst [vmem:[#allocation2 + $0xd0] sm:$0xff] %v1052
  %v1057 = vpack.c.bf16 %v1039, %v1035
  %v1058 = vpack.c.bf16 %v1041, %v1037
  %v1061 = vunpack.c.l.b16 %v1057
  %v1062 = vunpack.c.l.b16 %v1058
  %v1063 = vunpack.c.h.b16 %v1057
  %v1064 = vunpack.c.h.b16 %v1058
  %v1065 = vpack.c.b16 %v1062, %v1061
  %v1066 = vpack.c.b16 %v1064, %v1063
  %1069 = vst [vmem:[#allocation2 + $0xc8] sm:$0xff] %v1065
  %1070 = vst [vmem:[#allocation2 + $0xd8] sm:$0xff] %v1066
  %v1071 = vld [vmem:[%s0] sm:$0xf]
  %v1072 = vld [vmem:[%s0 + $0x4] sm:$0xf]
  %v1073 = vld [vmem:[%s0 + $0x8] sm:$0xf]
  %v1074 = vld [vmem:[%s0 + $0xc] sm:$0xf]
  %s1075 = scalar_lea.vmem %s2, 448
  %v1076 = vld [vmem:[%s1075] sm:$0xff]
  %v1077 = vld [vmem:[%s1075 + $0x8] sm:$0xff]
  %v1078 = vld [vmem:[%s1075 + $0x10] sm:$0xff]
  %v1079 = vld [vmem:[%s1075 + $0x18] sm:$0xff]
  %v1080 = vld [vmem:[%s1075 + $0x20] sm:$0xff]
  %v1081 = vld [vmem:[%s1075 + $0x28] sm:$0xff]
  %v1082 = vld [vmem:[%s1075 + $0x30] sm:$0xff]
  %v1083 = vld [vmem:[%s1075 + $0x38] sm:$0xff]
  %v1088 = vunpack.c.l.b16 %v1071
  %v1089 = vunpack.c.l.b16 %v1072
  %v1090 = vunpack.c.l.b16 %v1073
  %v1091 = vunpack.c.l.b16 %v1074
  %v1092 = vpack.c.b16 %v1089, %v1088
  %v1093 = vpack.c.b16 %v1091, %v1090
  %v1102 = vunpack.c.l.b16 %v1076
  %v1103 = vunpack.c.h.b16 %v1076
  %v1104 = vunpack.c.l.b16 %v1077
  %v1105 = vunpack.c.h.b16 %v1077
  %v1106 = vunpack.c.l.b16 %v1078
  %v1107 = vunpack.c.h.b16 %v1078
  %v1108 = vunpack.c.l.b16 %v1079
  %v1109 = vunpack.c.h.b16 %v1079
  %v1110 = vunpack.c.l.b16 %v1080
  %v1111 = vunpack.c.h.b16 %v1080
  %v1112 = vunpack.c.l.b16 %v1081
  %v1113 = vunpack.c.h.b16 %v1081
  %v1114 = vunpack.c.l.b16 %v1082
  %v1115 = vunpack.c.h.b16 %v1082
  %v1116 = vunpack.c.l.b16 %v1083
  %v1117 = vunpack.c.h.b16 %v1083
  %v1118 = vpack.c.b16 %v1104, %v1102
  %v1119 = vpack.c.b16 %v1105, %v1103
  %v1120 = vpack.c.b16 %v1108, %v1106
  %v1121 = vpack.c.b16 %v1109, %v1107
  %v1122 = vpack.c.b16 %v1112, %v1110
  %v1123 = vpack.c.b16 %v1113, %v1111
  %v1124 = vpack.c.b16 %v1116, %v1114
  %v1125 = vpack.c.b16 %v1117, %v1115
  %v1135 = vsel %vm83, %v1092, 0
  %v1138 = vsel %vm83, %v1093, 0
  %1140 = vmatprep.subr.bf16.mxu0 0
  %1141 = vmatpush1.bf16.msra.mxu0 0
  %1142 = vmatprep.subr.bf16.mxu0 0
  %1143 = vmatpush1.bf16.msra.mxu0 0
  %1144 = vmatprep.subr.bf16.mxu0 0
  %1145 = vmatpush1.bf16.msra.mxu0 0
  %1146 = vmatprep.subr.bf16.mxu0 0
  %1147 = vmatpush1.bf16.msra.mxu0 0
  %1148 = vmatprep.subr.bf16.mxu0 %v1125
  %1149 = vmatpush1.bf16.msra.mxu0 %v1124
  %1150 = vmatprep.subr.bf16.mxu0 %v1123
  %1151 = vmatpush1.bf16.msra.mxu0 %v1122
  %1152 = vmatprep.subr.bf16.mxu0 %v1121
  %1153 = vmatpush1.bf16.msra.mxu0 %v1120
  %1154 = vmatprep.subr.bf16.mxu0 %v1119
  %1155 = vmatpush1.bf16.msra.mxu0 %v1118
  %1156 = vmatprep.subr.bf16.mxu0 0
  %1157 = vmatpush2.bf16.msra.mxu0 0
  %1158 = vmatprep.subr.bf16.mxu0 0
  %1159 = vmatpush2.bf16.msra.mxu0 0
  %1160 = vmatprep.subr.bf16.mxu0 0
  %1161 = vmatpush2.bf16.msra.mxu0 0
  %1162 = vmatprep.subr.bf16.mxu0 0
  %1163 = vmatpush2.bf16.msra.mxu0 0
  %1164 = vmatprep.subr.bf16.mxu0 0
  %1165 = vmatpush2.bf16.msra.mxu0 0
  %1166 = vmatprep.subr.bf16.mxu0 0
  %1167 = vmatpush2.bf16.msra.mxu0 0
  %1168 = vmatprep.subr.bf16.mxu0 0
  %1169 = vmatpush2.bf16.msra.mxu0 0
  %1170 = vmatprep.subr.bf16.mxu0 0
  %1171 = vmatpush2.bf16.msra.mxu0 0
  %1172 = vmatprep.mubr.bf16.mxu0 0
  %1173 = vmatmul.mubr.bf16.gmra.mxu0 %v1135
  %v1174 = vpop.f32.mrf.mxu0
  %v1175 = vadd.f32 0.0, %v1174
  %v1176 = vpop.f32.mrf.mxu0
  %v1177 = vadd.f32 0.0, %v1176
  %v1178 = vpop.f32.mrf.mxu0
  %v1179 = vadd.f32 0.0, %v1178
  %v1180 = vpop.f32.mrf.mxu0
  %v1181 = vadd.f32 0.0, %v1180
  %1182 = vmatprep.mubr.bf16.mxu0 0
  %1183 = vmatmul.mubr.bf16.gmra.mxu0 %v1138
  %v1184 = vpop.f32.mrf.mxu0
  %v1185 = vadd.f32 0.0, %v1184
  %v1186 = vpop.f32.mrf.mxu0
  %v1187 = vadd.f32 0.0, %v1186
  %v1188 = vpop.f32.mrf.mxu0
  %v1189 = vadd.f32 0.0, %v1188
  %v1190 = vpop.f32.mrf.mxu0
  %v1191 = vadd.f32 0.0, %v1190
  %1192 = vdwg.mxu0
  %v1193 = vpack.c.bf16 %v1179, %v1175
  %v1194 = vpack.c.bf16 %v1181, %v1177
  %v1197 = vunpack.c.l.b16 %v1193
  %v1198 = vunpack.c.l.b16 %v1194
  %v1199 = vunpack.c.h.b16 %v1193
  %v1200 = vunpack.c.h.b16 %v1194
  %v1201 = vpack.c.b16 %v1198, %v1197
  %v1202 = vpack.c.b16 %v1200, %v1199
  %1205 = vst [vmem:[#allocation2 + $0xe0] sm:$0xff] %v1201
  %1206 = vst [vmem:[#allocation2 + $0xf0] sm:$0xff] %v1202
  %v1207 = vpack.c.bf16 %v1189, %v1185
  %v1208 = vpack.c.bf16 %v1191, %v1187
  %v1211 = vunpack.c.l.b16 %v1207
  %v1212 = vunpack.c.l.b16 %v1208
  %v1213 = vunpack.c.h.b16 %v1207
  %v1214 = vunpack.c.h.b16 %v1208
  %v1215 = vpack.c.b16 %v1212, %v1211
  %v1216 = vpack.c.b16 %v1214, %v1213
  %1219 = vst [vmem:[#allocation2 + $0xe8] sm:$0xff] %v1215
  %1220 = vst [vmem:[#allocation2 + $0xf8] sm:$0xff] %v1216
  %v1221 = vld [vmem:[%s0] sm:$0xf]
  %v1222 = vld [vmem:[%s0 + $0x4] sm:$0xf]
  %v1223 = vld [vmem:[%s0 + $0x8] sm:$0xf]
  %v1224 = vld [vmem:[%s0 + $0xc] sm:$0xf]
  %s1225 = scalar_lea.vmem %s2, 512
  %v1226 = vld [vmem:[%s1225] sm:$0xff]
  %v1227 = vld [vmem:[%s1225 + $0x8] sm:$0xff]
  %v1228 = vld [vmem:[%s1225 + $0x10] sm:$0xff]
  %v1229 = vld [vmem:[%s1225 + $0x18] sm:$0xff]
  %v1230 = vld [vmem:[%s1225 + $0x20] sm:$0xff]
  %v1231 = vld [vmem:[%s1225 + $0x28] sm:$0xff]
  %v1232 = vld [vmem:[%s1225 + $0x30] sm:$0xff]
  %v1233 = vld [vmem:[%s1225 + $0x38] sm:$0xff]
  %v1238 = vunpack.c.l.b16 %v1221
  %v1239 = vunpack.c.l.b16 %v1222
  %v1240 = vunpack.c.l.b16 %v1223
  %v1241 = vunpack.c.l.b16 %v1224
  %v1242 = vpack.c.b16 %v1239, %v1238
  %v1243 = vpack.c.b16 %v1241, %v1240
  %v1252 = vunpack.c.l.b16 %v1226
  %v1253 = vunpack.c.h.b16 %v1226
  %v1254 = vunpack.c.l.b16 %v1227
  %v1255 = vunpack.c.h.b16 %v1227
  %v1256 = vunpack.c.l.b16 %v1228
  %v1257 = vunpack.c.h.b16 %v1228
  %v1258 = vunpack.c.l.b16 %v1229
  %v1259 = vunpack.c.h.b16 %v1229
  %v1260 = vunpack.c.l.b16 %v1230
  %v1261 = vunpack.c.h.b16 %v1230
  %v1262 = vunpack.c.l.b16 %v1231
  %v1263 = vunpack.c.h.b16 %v1231
  %v1264 = vunpack.c.l.b16 %v1232
  %v1265 = vunpack.c.h.b16 %v1232
  %v1266 = vunpack.c.l.b16 %v1233
  %v1267 = vunpack.c.h.b16 %v1233
  %v1268 = vpack.c.b16 %v1254, %v1252
  %v1269 = vpack.c.b16 %v1255, %v1253
  %v1270 = vpack.c.b16 %v1258, %v1256
  %v1271 = vpack.c.b16 %v1259, %v1257
  %v1272 = vpack.c.b16 %v1262, %v1260
  %v1273 = vpack.c.b16 %v1263, %v1261
  %v1274 = vpack.c.b16 %v1266, %v1264
  %v1275 = vpack.c.b16 %v1267, %v1265
  %v1285 = vsel %vm83, %v1242, 0
  %v1288 = vsel %vm83, %v1243, 0
  %1290 = vmatprep.subr.bf16.mxu0 0
  %1291 = vmatpush1.bf16.msra.mxu0 0
  %1292 = vmatprep.subr.bf16.mxu0 0
  %1293 = vmatpush1.bf16.msra.mxu0 0
  %1294 = vmatprep.subr.bf16.mxu0 0
  %1295 = vmatpush1.bf16.msra.mxu0 0
  %1296 = vmatprep.subr.bf16.mxu0 0
  %1297 = vmatpush1.bf16.msra.mxu0 0
  %1298 = vmatprep.subr.bf16.mxu0 %v1275
  %1299 = vmatpush1.bf16.msra.mxu0 %v1274
  %1300 = vmatprep.subr.bf16.mxu0 %v1273
  %1301 = vmatpush1.bf16.msra.mxu0 %v1272
  %1302 = vmatprep.subr.bf16.mxu0 %v1271
  %1303 = vmatpush1.bf16.msra.mxu0 %v1270
  %1304 = vmatprep.subr.bf16.mxu0 %v1269
  %1305 = vmatpush1.bf16.msra.mxu0 %v1268
  %1306 = vmatprep.subr.bf16.mxu0 0
  %1307 = vmatpush2.bf16.msra.mxu0 0
  %1308 = vmatprep.subr.bf16.mxu0 0
  %1309 = vmatpush2.bf16.msra.mxu0 0
  %1310 = vmatprep.subr.bf16.mxu0 0
  %1311 = vmatpush2.bf16.msra.mxu0 0
  %1312 = vmatprep.subr.bf16.mxu0 0
  %1313 = vmatpush2.bf16.msra.mxu0 0
  %1314 = vmatprep.subr.bf16.mxu0 0
  %1315 = vmatpush2.bf16.msra.mxu0 0
  %1316 = vmatprep.subr.bf16.mxu0 0
  %1317 = vmatpush2.bf16.msra.mxu0 0
  %1318 = vmatprep.subr.bf16.mxu0 0
  %1319 = vmatpush2.bf16.msra.mxu0 0
  %1320 = vmatprep.subr.bf16.mxu0 0
  %1321 = vmatpush2.bf16.msra.mxu0 0
  %1322 = vmatprep.mubr.bf16.mxu0 0
  %1323 = vmatmul.mubr.bf16.gmra.mxu0 %v1285
  %v1324 = vpop.f32.mrf.mxu0
  %v1325 = vadd.f32 0.0, %v1324
  %v1326 = vpop.f32.mrf.mxu0
  %v1327 = vadd.f32 0.0, %v1326
  %v1328 = vpop.f32.mrf.mxu0
  %v1329 = vadd.f32 0.0, %v1328
  %v1330 = vpop.f32.mrf.mxu0
  %v1331 = vadd.f32 0.0, %v1330
  %1332 = vmatprep.mubr.bf16.mxu0 0
  %1333 = vmatmul.mubr.bf16.gmra.mxu0 %v1288
  %v1334 = vpop.f32.mrf.mxu0
  %v1335 = vadd.f32 0.0, %v1334
  %v1336 = vpop.f32.mrf.mxu0
  %v1337 = vadd.f32 0.0, %v1336
  %v1338 = vpop.f32.mrf.mxu0
  %v1339 = vadd.f32 0.0, %v1338
  %v1340 = vpop.f32.mrf.mxu0
  %v1341 = vadd.f32 0.0, %v1340
  %1342 = vdwg.mxu0
  %v1343 = vpack.c.bf16 %v1329, %v1325
  %v1344 = vpack.c.bf16 %v1331, %v1327
  %v1347 = vunpack.c.l.b16 %v1343
  %v1348 = vunpack.c.l.b16 %v1344
  %v1349 = vunpack.c.h.b16 %v1343
  %v1350 = vunpack.c.h.b16 %v1344
  %v1351 = vpack.c.b16 %v1348, %v1347
  %v1352 = vpack.c.b16 %v1350, %v1349
  %1355 = vst [vmem:[#allocation2 + $0x100] sm:$0xff] %v1351
  %1356 = vst [vmem:[#allocation2 + $0x110] sm:$0xff] %v1352
  %v1357 = vpack.c.bf16 %v1339, %v1335
  %v1358 = vpack.c.bf16 %v1341, %v1337
  %v1361 = vunpack.c.l.b16 %v1357
  %v1362 = vunpack.c.l.b16 %v1358
  %v1363 = vunpack.c.h.b16 %v1357
  %v1364 = vunpack.c.h.b16 %v1358
  %v1365 = vpack.c.b16 %v1362, %v1361
  %v1366 = vpack.c.b16 %v1364, %v1363
  %1369 = vst [vmem:[#allocation2 + $0x108] sm:$0xff] %v1365
  %1370 = vst [vmem:[#allocation2 + $0x118] sm:$0xff] %v1366
  %v1371 = vld [vmem:[%s3] sm:$0xff]
  %v1372 = vld [vmem:[%s3 + $0x8] sm:$0xff]
  %v1373 = vld [vmem:[%s3 + $0x10] sm:$0xff]
  %v1374 = vld [vmem:[%s3 + $0x18] sm:$0xff]
  %v1375 = vld [vmem:[#allocation2] sm:$0xff]
  %v1376 = vld [vmem:[#allocation2 + $0x8] sm:$0xff]
  %v1377 = vld [vmem:[#allocation2 + $0x10] sm:$0xff]
  %v1378 = vld [vmem:[#allocation2 + $0x18] sm:$0xff]
  %v1379 = vld [vmem:[#allocation2 + $0x20] sm:$0xff]
  %v1380 = vld [vmem:[#allocation2 + $0x28] sm:$0xff]
  %v1381 = vld [vmem:[#allocation2 + $0x30] sm:$0xff]
  %v1382 = vld [vmem:[#allocation2 + $0x38] sm:$0xff]
  %v1383 = vld [vmem:[#allocation2 + $0x40] sm:$0xff]
  %v1384 = vld [vmem:[#allocation2 + $0x48] sm:$0xff]
  %v1385 = vld [vmem:[#allocation2 + $0x50] sm:$0xff]
  %v1386 = vld [vmem:[#allocation2 + $0x58] sm:$0xff]
  %v1387 = vld [vmem:[#allocation2 + $0x60] sm:$0xff]
  %v1388 = vld [vmem:[#allocation2 + $0x68] sm:$0xff]
  %v1389 = vld [vmem:[#allocation2 + $0x70] sm:$0xff]
  %v1390 = vld [vmem:[#allocation2 + $0x78] sm:$0xff]
  %v1391 = vld [vmem:[#allocation2 + $0x80] sm:$0xff]
  %v1392 = vld [vmem:[#allocation2 + $0x88] sm:$0xff]
  %v1393 = vld [vmem:[#allocation2 + $0x90] sm:$0xff]
  %v1394 = vld [vmem:[#allocation2 + $0x98] sm:$0xff]
  %v1395 = vld [vmem:[#allocation2 + $0xa0] sm:$0xff]
  %v1396 = vld [vmem:[#allocation2 + $0xa8] sm:$0xff]
  %v1397 = vld [vmem:[#allocation2 + $0xb0] sm:$0xff]
  %v1398 = vld [vmem:[#allocation2 + $0xb8] sm:$0xff]
  %v1399 = vld [vmem:[#allocation2 + $0xc0] sm:$0xff]
  %v1400 = vld [vmem:[#allocation2 + $0xc8] sm:$0xff]
  %v1401 = vld [vmem:[#allocation2 + $0xd0] sm:$0xff]
  %v1402 = vld [vmem:[#allocation2 + $0xd8] sm:$0xff]
  %v1403 = vld [vmem:[#allocation2 + $0xe0] sm:$0xff]
  %v1404 = vld [vmem:[#allocation2 + $0xe8] sm:$0xff]
  %v1405 = vld [vmem:[#allocation2 + $0xf0] sm:$0xff]
  %v1406 = vld [vmem:[#allocation2 + $0xf8] sm:$0xff]
  %v1407 = vld [vmem:[#allocation2 + $0x100] sm:$0xff]
  %v1408 = vld [vmem:[#allocation2 + $0x108] sm:$0xff]
  %v1409 = vld [vmem:[#allocation2 + $0x110] sm:$0xff]
  %v1410 = vld [vmem:[#allocation2 + $0x118] sm:$0xff]
  %v1415 = vunpack.c.l.b16 %v1371
  %v1416 = vunpack.c.h.b16 %v1371
  %v1417 = vunpack.c.l.b16 %v1372
  %v1418 = vunpack.c.h.b16 %v1372
  %v1419 = vunpack.c.l.b16 %v1373
  %v1420 = vunpack.c.h.b16 %v1373
  %v1421 = vunpack.c.l.b16 %v1374
  %v1422 = vunpack.c.h.b16 %v1374
  %v1423 = vpack.c.b16 %v1417, %v1415
  %v1424 = vpack.c.b16 %v1418, %v1416
  %v1425 = vpack.c.b16 %v1421, %v1419
  %v1426 = vpack.c.b16 %v1422, %v1420
  %v1465 = vunpack.c.l.b16 %v1375
  %v1466 = vunpack.c.h.b16 %v1375
  %v1467 = vunpack.c.l.b16 %v1376
  %v1468 = vunpack.c.h.b16 %v1376
  %v1469 = vunpack.c.l.b16 %v1377
  %v1470 = vunpack.c.h.b16 %v1377
  %v1471 = vunpack.c.l.b16 %v1378
  %v1472 = vunpack.c.h.b16 %v1378
  %v1473 = vunpack.c.l.b16 %v1379
  %v1474 = vunpack.c.h.b16 %v1379
  %v1475 = vunpack.c.l.b16 %v1380
  %v1476 = vunpack.c.h.b16 %v1380
  %v1477 = vunpack.c.l.b16 %v1381
  %v1478 = vunpack.c.h.b16 %v1381
  %v1479 = vunpack.c.l.b16 %v1382
  %v1480 = vunpack.c.h.b16 %v1382
  %v1481 = vunpack.c.l.b16 %v1383
  %v1482 = vunpack.c.h.b16 %v1383
  %v1483 = vunpack.c.l.b16 %v1384
  %v1484 = vunpack.c.h.b16 %v1384
  %v1485 = vunpack.c.l.b16 %v1385
  %v1486 = vunpack.c.h.b16 %v1385
  %v1487 = vunpack.c.l.b16 %v1386
  %v1488 = vunpack.c.h.b16 %v1386
  %v1489 = vunpack.c.l.b16 %v1387
  %v1490 = vunpack.c.h.b16 %v1387
  %v1491 = vunpack.c.l.b16 %v1388
  %v1492 = vunpack.c.h.b16 %v1388
  %v1493 = vunpack.c.l.b16 %v1389
  %v1494 = vunpack.c.h.b16 %v1389
  %v1495 = vunpack.c.l.b16 %v1390
  %v1496 = vunpack.c.h.b16 %v1390
  %v1497 = vunpack.c.l.b16 %v1391
  %v1498 = vunpack.c.h.b16 %v1391
  %v1499 = vunpack.c.l.b16 %v1392
  %v1500 = vunpack.c.h.b16 %v1392
  %v1501 = vunpack.c.l.b16 %v1393
  %v1502 = vunpack.c.h.b16 %v1393
  %v1503 = vunpack.c.l.b16 %v1394
  %v1504 = vunpack.c.h.b16 %v1394
  %v1505 = vunpack.c.l.b16 %v1395
  %v1506 = vunpack.c.h.b16 %v1395
  %v1507 = vunpack.c.l.b16 %v1396
  %v1508 = vunpack.c.h.b16 %v1396
  %v1509 = vunpack.c.l.b16 %v1397
  %v1510 = vunpack.c.h.b16 %v1397
  %v1511 = vunpack.c.l.b16 %v1398
  %v1512 = vunpack.c.h.b16 %v1398
  %v1513 = vunpack.c.l.b16 %v1399
  %v1514 = vunpack.c.h.b16 %v1399
  %v1515 = vunpack.c.l.b16 %v1400
  %v1516 = vunpack.c.h.b16 %v1400
  %v1517 = vunpack.c.l.b16 %v1401
  %v1518 = vunpack.c.h.b16 %v1401
  %v1519 = vunpack.c.l.b16 %v1402
  %v1520 = vunpack.c.h.b16 %v1402
  %v1521 = vunpack.c.l.b16 %v1403
  %v1522 = vunpack.c.h.b16 %v1403
  %v1523 = vunpack.c.l.b16 %v1404
  %v1524 = vunpack.c.h.b16 %v1404
  %v1525 = vunpack.c.l.b16 %v1405
  %v1526 = vunpack.c.h.b16 %v1405
  %v1527 = vunpack.c.l.b16 %v1406
  %v1528 = vunpack.c.h.b16 %v1406
  %v1529 = vunpack.c.l.b16 %v1407
  %v1530 = vunpack.c.h.b16 %v1407
  %v1531 = vunpack.c.l.b16 %v1408
  %v1532 = vunpack.c.h.b16 %v1408
  %v1533 = vunpack.c.l.b16 %v1409
  %v1534 = vunpack.c.h.b16 %v1409
  %v1535 = vunpack.c.l.b16 %v1410
  %v1536 = vunpack.c.h.b16 %v1410
  %v1537 = vpack.c.b16 %v1469, %v1465
  %v1538 = vpack.c.b16 %v1470, %v1466
  %v1539 = vpack.c.b16 %v1471, %v1467
  %v1540 = vpack.c.b16 %v1472, %v1468
  %v1541 = vpack.c.b16 %v1477, %v1473
  %v1542 = vpack.c.b16 %v1478, %v1474
  %v1543 = vpack.c.b16 %v1479, %v1475
  %v1544 = vpack.c.b16 %v1480, %v1476
  %v1545 = vpack.c.b16 %v1485, %v1481
  %v1546 = vpack.c.b16 %v1486, %v1482
  %v1547 = vpack.c.b16 %v1487, %v1483
  %v1548 = vpack.c.b16 %v1488, %v1484
  %v1549 = vpack.c.b16 %v1493, %v1489
  %v1550 = vpack.c.b16 %v1494, %v1490
  %v1551 = vpack.c.b16 %v1495, %v1491
  %v1552 = vpack.c.b16 %v1496, %v1492
  %v1553 = vpack.c.b16 %v1501, %v1497
  %v1554 = vpack.c.b16 %v1502, %v1498
  %v1555 = vpack.c.b16 %v1503, %v1499
  %v1556 = vpack.c.b16 %v1504, %v1500
  %v1557 = vpack.c.b16 %v1509, %v1505
  %v1558 = vpack.c.b16 %v1510, %v1506
  %v1559 = vpack.c.b16 %v1511, %v1507
  %v1560 = vpack.c.b16 %v1512, %v1508
  %v1561 = vpack.c.b16 %v1517, %v1513
  %v1562 = vpack.c.b16 %v1518, %v1514
  %v1563 = vpack.c.b16 %v1519, %v1515
  %v1564 = vpack.c.b16 %v1520, %v1516
  %v1565 = vpack.c.b16 %v1525, %v1521
  %v1566 = vpack.c.b16 %v1526, %v1522
  %v1567 = vpack.c.b16 %v1527, %v1523
  %v1568 = vpack.c.b16 %v1528, %v1524
  %v1569 = vpack.c.b16 %v1533, %v1529
  %v1570 = vpack.c.b16 %v1534, %v1530
  %v1571 = vpack.c.b16 %v1535, %v1531
  %v1572 = vpack.c.b16 %v1536, %v1532
  %vm1609 = vcmask 130048
  %v1611 = vsel %vm1609, %v1424, 0
  %v1614 = vsel %vm1609, %v1426, 0
  %1616 = vmatprep.subr.bf16.mxu0 %v1566
  %1617 = vmatpush1.bf16.msra.mxu0 %v1565
  %1618 = vmatprep.subr.bf16.mxu0 %v1562
  %1619 = vmatpush1.bf16.msra.mxu0 %v1561
  %1620 = vmatprep.subr.bf16.mxu0 %v1558
  %1621 = vmatpush1.bf16.msra.mxu0 %v1557
  %1622 = vmatprep.subr.bf16.mxu0 %v1554
  %1623 = vmatpush1.bf16.msra.mxu0 %v1553
  %1624 = vmatprep.subr.bf16.mxu0 %v1550
  %1625 = vmatpush1.bf16.msra.mxu0 %v1549
  %1626 = vmatprep.subr.bf16.mxu0 %v1546
  %1627 = vmatpush1.bf16.msra.mxu0 %v1545
  %1628 = vmatprep.subr.bf16.mxu0 %v1542
  %1629 = vmatpush1.bf16.msra.mxu0 %v1541
  %1630 = vmatprep.subr.bf16.mxu0 %v1538
  %1631 = vmatpush1.bf16.msra.mxu0 %v1537
  %1632 = vmatprep.subr.bf16.mxu0 0
  %1633 = vmatpush2.bf16.msra.mxu0 0
  %1634 = vmatprep.subr.bf16.mxu0 0
  %1635 = vmatpush2.bf16.msra.mxu0 0
  %1636 = vmatprep.subr.bf16.mxu0 0
  %1637 = vmatpush2.bf16.msra.mxu0 0
  %1638 = vmatprep.subr.bf16.mxu0 0
  %1639 = vmatpush2.bf16.msra.mxu0 0
  %1640 = vmatprep.subr.bf16.mxu0 0
  %1641 = vmatpush2.bf16.msra.mxu0 0
  %1642 = vmatprep.subr.bf16.mxu0 0
  %1643 = vmatpush2.bf16.msra.mxu0 0
  %1644 = vmatprep.subr.bf16.mxu0 0
  %1645 = vmatpush2.bf16.msra.mxu0 0
  %1646 = vmatprep.subr.bf16.mxu0 %v1570
  %1647 = vmatpush2.bf16.msra.mxu0 %v1569
  %1648 = vmatprep.mubr.bf16.mxu0 %v1611
  %1649 = vmatmul.mubr.bf16.gmra.mxu0 %v1423
  %v1650 = vpop.f32.mrf.mxu0
  %v1651 = vadd.f32 0.0, %v1650
  %v1652 = vpop.f32.mrf.mxu0
  %v1653 = vadd.f32 0.0, %v1652
  %v1654 = vpop.f32.mrf.mxu0
  %v1655 = vadd.f32 0.0, %v1654
  %v1656 = vpop.f32.mrf.mxu0
  %v1657 = vadd.f32 0.0, %v1656
  %1658 = vmatprep.mubr.bf16.mxu0 %v1614
  %1659 = vmatmul.mubr.bf16.gmra.mxu0 %v1425
  %v1660 = vpop.f32.mrf.mxu0
  %v1661 = vadd.f32 0.0, %v1660
  %v1662 = vpop.f32.mrf.mxu0
  %v1663 = vadd.f32 0.0, %v1662
  %v1664 = vpop.f32.mrf.mxu0
  %v1665 = vadd.f32 0.0, %v1664
  %v1666 = vpop.f32.mrf.mxu0
  %v1667 = vadd.f32 0.0, %v1666
  %1668 = vdwg.mxu0
  %1669 = vmatprep.subr.bf16.mxu0 %v1568
  %1670 = vmatpush1.bf16.msra.mxu0 %v1567
  %1671 = vmatprep.subr.bf16.mxu0 %v1564
  %1672 = vmatpush1.bf16.msra.mxu0 %v1563
  %1673 = vmatprep.subr.bf16.mxu0 %v1560
  %1674 = vmatpush1.bf16.msra.mxu0 %v1559
  %1675 = vmatprep.subr.bf16.mxu0 %v1556
  %1676 = vmatpush1.bf16.msra.mxu0 %v1555
  %1677 = vmatprep.subr.bf16.mxu0 %v1552
  %1678 = vmatpush1.bf16.msra.mxu0 %v1551
  %1679 = vmatprep.subr.bf16.mxu0 %v1548
  %1680 = vmatpush1.bf16.msra.mxu0 %v1547
  %1681 = vmatprep.subr.bf16.mxu0 %v1544
  %1682 = vmatpush1.bf16.msra.mxu0 %v1543
  %1683 = vmatprep.subr.bf16.mxu0 %v1540
  %1684 = vmatpush1.bf16.msra.mxu0 %v1539
  %1685 = vmatprep.subr.bf16.mxu0 0
  %1686 = vmatpush2.bf16.msra.mxu0 0
  %1687 = vmatprep.subr.bf16.mxu0 0
  %1688 = vmatpush2.bf16.msra.mxu0 0
  %1689 = vmatprep.subr.bf16.mxu0 0
  %1690 = vmatpush2.bf16.msra.mxu0 0
  %1691 = vmatprep.subr.bf16.mxu0 0
  %1692 = vmatpush2.bf16.msra.mxu0 0
  %1693 = vmatprep.subr.bf16.mxu0 0
  %1694 = vmatpush2.bf16.msra.mxu0 0
  %1695 = vmatprep.subr.bf16.mxu0 0
  %1696 = vmatpush2.bf16.msra.mxu0 0
  %1697 = vmatprep.subr.bf16.mxu0 0
  %1698 = vmatpush2.bf16.msra.mxu0 0
  %1699 = vmatprep.subr.bf16.mxu0 %v1572
  %1700 = vmatpush2.bf16.msra.mxu0 %v1571
  %1701 = vmatprep.mubr.bf16.mxu0 %v1611
  %1702 = vmatmul.mubr.bf16.gmra.mxu0 %v1423
  %v1703 = vpop.f32.mrf.mxu0
  %v1704 = vadd.f32 0.0, %v1703
  %v1705 = vpop.f32.mrf.mxu0
  %v1706 = vadd.f32 0.0, %v1705
  %v1707 = vpop.f32.mrf.mxu0
  %v1708 = vadd.f32 0.0, %v1707
  %v1709 = vpop.f32.mrf.mxu0
  %v1710 = vadd.f32 0.0, %v1709
  %1711 = vmatprep.mubr.bf16.mxu0 %v1614
  %1712 = vmatmul.mubr.bf16.gmra.mxu0 %v1425
  %v1713 = vpop.f32.mrf.mxu0
  %v1714 = vadd.f32 0.0, %v1713
  %v1715 = vpop.f32.mrf.mxu0
  %v1716 = vadd.f32 0.0, %v1715
  %v1717 = vpop.f32.mrf.mxu0
  %v1718 = vadd.f32 0.0, %v1717
  %v1719 = vpop.f32.mrf.mxu0
  %v1720 = vadd.f32 0.0, %v1719
  %1721 = vdwg.mxu0
  %v1722 = vld [vmem:[%s4] sm:$0xff]
  %v1723 = vld [vmem:[%s4 + $0x8] sm:$0xff]
  %v1724 = vld [vmem:[%s4 + $0x10] sm:$0xff]
  %v1725 = vld [vmem:[%s4 + $0x18] sm:$0xff]
  %1727 = vset.pattern.permute.xlu0 0
  %1728 = vperm.xlu0 %1727, %v1722
  %v1729 = vpop.permute.xlu0 %1728
  %1732 = vset.pattern.permute.xlu0 0
  %1733 = vperm.xlu0 %1732, %v1723
  %v1734 = vpop.permute.xlu0 %1733
  %1737 = vset.pattern.permute.xlu0 0
  %1738 = vperm.xlu0 %1737, %v1724
  %v1739 = vpop.permute.xlu0 %1738
  %1742 = vset.pattern.permute.xlu0 0
  %1743 = vperm.xlu0 %1742, %v1725
  %v1744 = vpop.permute.xlu0 %1743
  %v1746 = vadd.f32 %v1651, %v1729
  %v1747 = vadd.f32 %v1653, %v1729
  %v1748 = vadd.f32 %v1655, %v1734
  %v1749 = vadd.f32 %v1657, %v1734
  %v1750 = vadd.f32 %v1661, %v1739
  %v1751 = vadd.f32 %v1663, %v1739
  %v1752 = vadd.f32 %v1665, %v1744
  %v1753 = vadd.f32 %v1667, %v1744
  %v1754 = vmax.f32 %v1746, 0.0
  %v1755 = vmax.f32 %v1747, 0.0
  %v1756 = vmax.f32 %v1748, 0.0
  %v1757 = vmax.f32 %v1749, 0.0
  %v1758 = vmax.f32 %v1750, 0.0
  %v1759 = vmax.f32 %v1751, 0.0
  %v1760 = vmax.f32 %v1752, 0.0
  %v1761 = vmax.f32 %v1753, 0.0
  %v1762 = vld [vmem:[%s1] sm:$0xff]
  %v1763 = vld [vmem:[%s1 + $0x8] sm:$0xff]
  %v1764 = vld [vmem:[%s1 + $0x10] sm:$0xff]
  %v1765 = vld [vmem:[%s1 + $0x18] sm:$0xff]
  %v1766 = vld [vmem:[%s1 + $0x20] sm:$0xff]
  %v1767 = vld [vmem:[%s1 + $0x28] sm:$0xff]
  %v1768 = vld [vmem:[%s1 + $0x30] sm:$0xff]
  %v1769 = vld [vmem:[%s1 + $0x38] sm:$0xff]
  %v1770 = vadd.f32 %v1754, %v1762
  %v1771 = vadd.f32 %v1755, %v1763
  %v1772 = vadd.f32 %v1756, %v1764
  %v1773 = vadd.f32 %v1757, %v1765
  %v1774 = vadd.f32 %v1758, %v1766
  %v1775 = vadd.f32 %v1759, %v1767
  %v1776 = vadd.f32 %v1760, %v1768
  %v1777 = vadd.f32 %v1761, %v1769
  %1778 = vst [vmem:[%s5] sm:$0xff] %v1770
  %1779 = vst [vmem:[%s5 + $0x8] sm:$0xff] %v1771
  %1780 = vst [vmem:[%s5 + $0x10] sm:$0xff] %v1772
  %1781 = vst [vmem:[%s5 + $0x18] sm:$0xff] %v1773
  %1782 = vst [vmem:[%s5 + $0x20] sm:$0xff] %v1774
  %1783 = vst [vmem:[%s5 + $0x28] sm:$0xff] %v1775
  %1784 = vst [vmem:[%s5 + $0x30] sm:$0xff] %v1776
  %1785 = vst [vmem:[%s5 + $0x38] sm:$0xff] %v1777
  %v1786 = vadd.f32 %v1704, %v1729
  %v1787 = vadd.f32 %v1706, %v1729
  %v1788 = vadd.f32 %v1708, %v1734
  %v1789 = vadd.f32 %v1710, %v1734
  %v1790 = vadd.f32 %v1714, %v1739
  %v1791 = vadd.f32 %v1716, %v1739
  %v1792 = vadd.f32 %v1718, %v1744
  %v1793 = vadd.f32 %v1720, %v1744
  %v1794 = vmax.f32 %v1786, 0.0
  %v1795 = vmax.f32 %v1787, 0.0
  %v1796 = vmax.f32 %v1788, 0.0
  %v1797 = vmax.f32 %v1789, 0.0
  %v1798 = vmax.f32 %v1790, 0.0
  %v1799 = vmax.f32 %v1791, 0.0
  %v1800 = vmax.f32 %v1792, 0.0
  %v1801 = vmax.f32 %v1793, 0.0
  %s1802 = scalar_lea.vmem %s1, 64
  %v1803 = vld [vmem:[%s1802] sm:$0xff]
  %v1804 = vld [vmem:[%s1802 + $0x8] sm:$0xff]
  %v1805 = vld [vmem:[%s1802 + $0x10] sm:$0xff]
  %v1806 = vld [vmem:[%s1802 + $0x18] sm:$0xff]
  %v1807 = vld [vmem:[%s1802 + $0x20] sm:$0xff]
  %v1808 = vld [vmem:[%s1802 + $0x28] sm:$0xff]
  %v1809 = vld [vmem:[%s1802 + $0x30] sm:$0xff]
  %v1810 = vld [vmem:[%s1802 + $0x38] sm:$0xff]
  %v1811 = vadd.f32 %v1794, %v1803
  %v1812 = vadd.f32 %v1795, %v1804
  %v1813 = vadd.f32 %v1796, %v1805
  %v1814 = vadd.f32 %v1797, %v1806
  %v1815 = vadd.f32 %v1798, %v1807
  %v1816 = vadd.f32 %v1799, %v1808
  %v1817 = vadd.f32 %v1800, %v1809
  %v1818 = vadd.f32 %v1801, %v1810
  %s1819 = scalar_lea.vmem %s5, 64
  %1820 = vst [vmem:[%s1819] sm:$0xff] %v1811
  %1821 = vst [vmem:[%s1819 + $0x8] sm:$0xff] %v1812
  %1822 = vst [vmem:[%s1819 + $0x10] sm:$0xff] %v1813
  %1823 = vst [vmem:[%s1819 + $0x18] sm:$0xff] %v1814
  %1824 = vst [vmem:[%s1819 + $0x20] sm:$0xff] %v1815
  %1825 = vst [vmem:[%s1819 + $0x28] sm:$0xff] %v1816
  %1826 = vst [vmem:[%s1819 + $0x30] sm:$0xff] %v1817
  %1827 = vst [vmem:[%s1819 + $0x38] sm:$0xff] %v1818
  // Predicated region
  $region22: #{gam_forward.1} parent=0 // pred_check
    _
  $region23: #{gam_forward.1} parent=0 // pred_check_branch
    %1829 = sbr.rel (0) target = $region25
  $region24: #{gam_forward.1} parent=0 // pred_region
    _
  $region25: #{gam_forward.1} parent=0 // pred_fallthru
    _
  // Predicated region
  $region26: #{gam_forward.1} parent=0 // pred_check
    _
  $region27: #{gam_forward.1} parent=0 // pred_check_branch
    %1831 = sbr.rel (0) target = $region29
  $region28: #{gam_forward.1} parent=0 // pred_region
    _
  $region29: #{gam_forward.1} parent=0 // pred_fallthru
    _

</llo_original>
